<compile_context>
chip_gen: v5e
topology: v5e:2x2
jax: 0.10.0
libtpu: 0.0.40
codegen_flags: <defaults>
</compile_context>

<pallas_src>
import jax
import jax.numpy as jnp
import numpy as np
from jax.experimental import pallas as pl
from jax.experimental.pallas import tpu as pltpu

BN_EPS = 1e-5
SUBLANE = 8


def _round_up(x, m):
    return ((x + m - 1) // m) * m


def _pad_vec(v, rows):
    out = np.zeros((rows, 1), np.float32)
    out[: np.asarray(v).shape[0], 0] = np.asarray(v)
    return out


# ---------------------------------------------------------------------------
# Fused decoder kernel (single invocation, everything VMEM-resident)
# ---------------------------------------------------------------------------
def _shifted(zk, delta, lane_idx, length):
    """Return an array holding zk[:, t + delta] at lane t, zero out of range.

    Uses an XLU lane rotation + VPU mask; no matrices, no MXU ops.
    """
    if delta == 0:
        return zk
    rolled = pltpu.roll(zk, shift=(-delta) % length, axis=1)
    mask = (lane_idx >= -delta) & (lane_idx < length - delta)
    return jnp.where(mask, rolled, 0.0)


def _make_decoder_kernel(cfg):
    n = cfg["n"]
    c0, c0_p, l0 = cfg["c0"], cfg["c0_p"], cfg["l0"]
    layers = cfg["layers"]
    fin = cfg["final"]

    def kernel(*refs):
        x_ref, out_ref = refs[0], refs[-1]
        wrefs = refs[1:-1]

        # ---- Input relayout (N, C, L) -> per-batch channel-major tiles,
        #      done once in VMEM (no standalone XLA transpose launch).
        hs = []
        for b in range(n):
            hb = x_ref[b]                                   # (c0, l0)
            if c0_p > c0:
                hb = jnp.concatenate(
                    [hb, jnp.zeros((c0_p - c0, l0), jnp.float32)], axis=0)
            hs.append(hb)

        ridx = 0
        for lyr in layers:
            k, s, pad = lyr["k"], lyr["s"], lyr["pad"]
            cp, l_in, l_out = lyr["c_out_p"], lyr["l_in"], lyr["l_out"]
            if lyr["use_shift"]:
                w_ref, b_ref, g_ref, bt_ref = wrefs[ridx:ridx + 4]
                ridx += 4
                p_ref = None
            else:
                w_ref, p_ref, b_ref, g_ref, bt_ref = wrefs[ridx:ridx + 5]
                ridx += 5
            w = w_ref[...]
            bias = b_ref[...]
            lane_idx = jax.lax.broadcasted_iota(jnp.int32, (cp, l_in), 1)

            # --- ConvTranspose1d: one stacked-tap channel-mix matmul per
            #     batch, then tap placement (roll+mask, or one tiny 0/1 matmul
            #     for stride>1).
            pres = []
            ssum = jnp.zeros((cp, 1), jnp.float32)
            for b in range(n):
                z = jnp.dot(w, hs[b], preferred_element_type=jnp.float32)
                if lyr["use_shift"]:
                    pre = jnp.zeros((cp, l_in), jnp.float32)
                    for t in range(k):
                        pre = pre + _shifted(z[t * cp:(t + 1) * cp, :],
                                             pad - t, lane_idx, l_in)
                else:
                    # TODO(synk): no clean strided-lane-write / lane-interleave
                    # primitive exists for stride>1 phase placement, so keep a
                    # tiny batch-shared 0/1 matmul (O(L^2), not O((N*L)^2)).
                    zcat = jnp.concatenate(
                        [z[t * cp:(t + 1) * cp, :] for t in range(k)], axis=1)
                    pre = jnp.dot(zcat, p_ref[...],
                                  preferred_element_type=jnp.float32)
                pre = pre + bias
                pres.append(pre)
                ssum = ssum + jnp.sum(pre, axis=1, keepdims=True)

            # --- BatchNorm1d (training-mode stats over the whole (N, L_out)),
            #     two-pass mean/var, affine folded into scale/shift, + ReLU.
            inv_cnt = 1.0 / float(n * l_out)
            mean = ssum * inv_cnt
            vsum = jnp.zeros((cp, 1), jnp.float32)
            for b in range(n):
                d = pres[b] - mean
                vsum = vsum + jnp.sum(d * d, axis=1, keepdims=True)
            var = vsum * inv_cnt
            scale = g_ref[...] * jax.lax.rsqrt(var + BN_EPS)
            shift = bt_ref[...] - mean * scale
            hs = [jnp.maximum(pres[b] * scale + shift, 0.0) for b in range(n)]

        # ---- Final Conv1d(kernel_size=2, valid) + Tanh, written straight to
        #      the (N, C, L) output (no post-kernel transpose).
        wf_ref, bf_ref = wrefs[ridx:ridx + 2]
        kf, dp, d_out = fin["k"], fin["d_out_p"], fin["d_out"]
        l_in, l_out = fin["l_in"], fin["l_out"]
        wf, bf = wf_ref[...], bf_ref[...]
        lane_idx = jax.lax.broadcasted_iota(jnp.int32, (dp, l_in), 1)
        for b in range(n):
            zf = jnp.dot(wf, hs[b], preferred_element_type=jnp.float32)
            y = jnp.zeros((dp, l_in), jnp.float32)
            for t in range(kf):
                y = y + _shifted(zf[t * dp:(t + 1) * dp, :], t, lane_idx, l_in)
            y = jnp.tanh(y + bf)
            out_ref[b, :, :] = y[0:d_out, 0:l_out]

    return kernel


def decoder_forward_pallas(x, prep_ct, prep_f, cfg):
    """x: (N, C0, L0) -> (N, ch_in, Lf).  One fused, gridless pallas_call."""
    n = cfg["n"]
    assert x.shape == (n, cfg["c0"], cfg["l0"])
    args = [x]
    for lyr_cfg, lp in zip(cfg["layers"], prep_ct):
        args.append(lp["W"])
        if not lyr_cfg["use_shift"]:
            args.append(lp["P"])
        args += [lp["b"], lp["g"], lp["bt"]]
    args += [prep_f["W"], prep_f["b"]]

    out_shape = jax.ShapeDtypeStruct(
        (n, cfg["final"]["d_out"], cfg["final"]["l_out"]), jnp.float32)
    return pl.pallas_call(
        _make_decoder_kernel(cfg),
        out_shape=out_shape,
        # Gridless: every tensor of this decoder is a few KB so the whole
        # forward stays VMEM-resident in a single invocation.
        # TODO(synk): at production N/L, make batch (or >=256-lane length
        # tiles) a "parallel" grid axis (v7x megacore) with a cross-tile
        # two-pass BatchNorm reduction, and re-derive working sets for v7x's
        # 64 MiB VMEM (pltpu.CompilerParams(vmem_limit_bytes=...)).
    )(*args)


# ---------------------------------------------------------------------------
# One-time parameter preprocessing (hoisted out of the forward pass)
# ---------------------------------------------------------------------------
def prepare_decoder(ct_params, final_params, ks, ss, ps, ops, n, l0):
    """Fold ConvTranspose taps into (K*Cout_pad, Cin_pad) stacks, pad channel
    blocks to sublane multiples, and build the small batch-shared placement
    matrices for stride>1 layers."""
    prep_ct, layer_cfgs = [], []
    l = l0
    c_in0 = ct_params[0]["wT"].shape[0]
    c_in0_p = _round_up(c_in0, SUBLANE)
    c_prev, c_prev_p = c_in0, c_in0_p
    for i, p in enumerate(ct_params):
        c_in, c_out, ksz = p["wT"].shape
        assert c_in == c_prev
        c_out_p = _round_up(c_out, SUBLANE)
        l_out = (l - 1) * ss[i] - 2 * ps[i] + ksz + ops[i]
        # Wstk[k*c_out_p + d, c] = wT[c, d, k]  (zero-padded rows/cols).
        wnp = np.zeros((ksz, c_out_p, c_prev_p), np.float32)
        wnp[:, :c_out, :c_in] = np.transpose(np.asarray(p["wT"]), (2, 1, 0))
        entry = dict(W=jnp.asarray(wnp.reshape(ksz * c_out_p, c_prev_p)),
                     b=jnp.asarray(_pad_vec(p["b"], c_out_p)),
                     g=jnp.asarray(_pad_vec(p["gamma"], c_out_p)),
                     bt=jnp.asarray(_pad_vec(p["beta"], c_out_p)))
        use_shift = (ss[i] == 1 and l_out == l)
        if not use_shift:
            # Batch-shared tap placement: P[k*l + pos, t] = 1 iff
            # t == pos*stride - padding + k  (no block-diag over batch).
            P = np.zeros((ksz, l, l_out), np.float32)
            for k in range(ksz):
                for pos in range(l):
                    t = pos * ss[i] - ps[i] + k
                    if 0 <= t < l_out:
                        P[k, pos, t] = 1.0
            entry["P"] = jnp.asarray(P.reshape(ksz * l, l_out))
        prep_ct.append(entry)
        layer_cfgs.append(dict(k=ksz, s=ss[i], pad=ps[i], l_in=l, l_out=l_out,
                               c_out_p=c_out_p, use_shift=use_shift))
        c_prev, c_prev_p = c_out, c_out_p
        l = l_out

    d_out, c_in, kf = final_params["w"].shape
    assert c_in == c_prev
    d_out_p = _round_up(d_out, SUBLANE)
    wfnp = np.zeros((kf, d_out_p, c_prev_p), np.float32)
    wfnp[:, :d_out, :c_in] = np.transpose(np.asarray(final_params["w"]),
                                          (2, 0, 1))
    prep_f = dict(W=jnp.asarray(wfnp.reshape(kf * d_out_p, c_prev_p)),
                  b=jnp.asarray(_pad_vec(final_params["b"], d_out_p)))
    final_cfg = dict(k=kf, d_out=d_out, d_out_p=d_out_p,
                     l_in=l, l_out=l - kf + 1)
    cfg = dict(n=n, c0=c_in0, c0_p=c_in0_p, l0=l0,
               layers=layer_cfgs, final=final_cfg)
    return prep_ct, prep_f, cfg


def init_params(key, ch_in, hids, ks):
    """Deterministic synthetic parameters matching the module's shapes."""
    ct_params = []
    in_chs = list(hids[:-1]) + [hids[-1]]
    out_chs = list(hids[1:]) + [hids[-1]]
    for i in range(len(in_chs)):
        key, k1, k2 = jax.random.split(key, 3)
        c_in, c_out, ksz = in_chs[i], out_chs[i], ks[i]
        ct_params.append(dict(
            wT=0.1 * jax.random.normal(k1, (c_in, c_out, ksz), jnp.float32),
            b=0.1 * jax.random.normal(k2, (c_out,), jnp.float32),
            gamma=jnp.ones((c_out,), jnp.float32),
            beta=jnp.zeros((c_out,), jnp.float32),
        ))
    key, k1, k2 = jax.random.split(key, 3)
    final_params = dict(
        w=0.1 * jax.random.normal(k1, (ch_in, hids[-1], 2), jnp.float32),
        b=0.1 * jax.random.normal(k2, (ch_in,), jnp.float32),
    )
    return ct_params, final_params


# ---------------------------------------------------------------------------
# Pure-JAX reference (independent formulation via conv_general_dilated, f32
# HIGHEST precision -> "ground truth")
# ---------------------------------------------------------------------------
def decoder_forward_ref(x, ct_params, final_params, ks, ss, ps, ops):
    h = x
    for i, p in enumerate(ct_params):
        ksz = p["wT"].shape[2]
        w = jnp.transpose(jnp.flip(p["wT"], axis=2), (1, 0, 2))  # (Cout, Cin, K)
        h = jax.lax.conv_general_dilated(
            h, w, window_strides=(1,),
            padding=[(ksz - 1 - ps[i], ksz - 1 - ps[i] + ops[i])],
            lhs_dilation=(ss[i],),
            dimension_numbers=("NCH", "OIH", "NCH"),
            precision=jax.lax.Precision.HIGHEST)
        h = h + p["b"][None, :, None]
        mean = jnp.mean(h, axis=(0, 2), keepdims=True)
        var = jnp.mean((h - mean) ** 2, axis=(0, 2), keepdims=True)
        h = (h - mean) * jax.lax.rsqrt(var + BN_EPS)
        h = h * p["gamma"][None, :, None] + p["beta"][None, :, None]
        h = jnp.maximum(h, 0.0)
    h = jax.lax.conv_general_dilated(
        h, final_params["w"], window_strides=(1,), padding="VALID",
        dimension_numbers=("NCH", "OIH", "NCH"),
        precision=jax.lax.Precision.HIGHEST)
    return jnp.tanh(h + final_params["b"][None, :, None])


# ---------------------------------------------------------------------------
if __name__ == "__main__":
    # Small decoder config consistent with the module's constructor arguments.
    ch_in = 4
    hids = [32, 16, 8]
    ks = [3, 3, 3]
    ss = [2, 2, 1]
    ps = [1, 1, 1]
    ops = [1, 1, 0]

    key = jax.random.PRNGKey(0)
    key, xk = jax.random.split(key)
    x = jax.random.normal(xk, (2, hids[0], 8), jnp.float32)   # (N, C, L)

    ct_params, final_params = init_params(key, ch_in, hids, ks)
    prep_ct, prep_f, cfg = prepare_decoder(ct_params, final_params,
                                           ks, ss, ps, ops,
                                           n=x.shape[0], l0=x.shape[2])

    fwd = jax.jit(lambda xx, pc, pf: decoder_forward_pallas(xx, pc, pf, cfg))
    y = jax.block_until_ready(fwd(x, prep_ct, prep_f))

    y_ref = decoder_forward_ref(x, ct_params, final_params, ks, ss, ps, ops)
    # Kernel matmuls use default MXU precision (bf16 mantissa passes); the
    # reference is f32 HIGHEST, so the tolerance reflects rounding, not
    # algorithmic error.
    np.testing.assert_allclose(np.asarray(y), np.asarray(y_ref),
                               rtol=5e-2, atol=5e-2)
    # L: 8 -> 16 -> 32 -> 32 -> (conv k=2) 31
    assert y.shape == (2, ch_in, 31), y.shape

    print("KERNEL_OK")
</pallas_src>

<mosaic_0001>
module attributes {stable_mosaic.version = 11 : i64} {
  func.func @kernel(%arg0: memref<2x32x8xf32, #tpu.memory_space<vmem>>, %arg1: memref<48x32xf32, #tpu.memory_space<vmem>>, %arg2: memref<24x16xf32, #tpu.memory_space<vmem>>, %arg3: memref<16x1xf32, #tpu.memory_space<vmem>>, %arg4: memref<16x1xf32, #tpu.memory_space<vmem>>, %arg5: memref<16x1xf32, #tpu.memory_space<vmem>>, %arg6: memref<24x16xf32, #tpu.memory_space<vmem>>, %arg7: memref<48x32xf32, #tpu.memory_space<vmem>>, %arg8: memref<8x1xf32, #tpu.memory_space<vmem>>, %arg9: memref<8x1xf32, #tpu.memory_space<vmem>>, %arg10: memref<8x1xf32, #tpu.memory_space<vmem>>, %arg11: memref<24x8xf32, #tpu.memory_space<vmem>>, %arg12: memref<8x1xf32, #tpu.memory_space<vmem>>, %arg13: memref<8x1xf32, #tpu.memory_space<vmem>>, %arg14: memref<8x1xf32, #tpu.memory_space<vmem>>, %arg15: memref<16x8xf32, #tpu.memory_space<vmem>>, %arg16: memref<8x1xf32, #tpu.memory_space<vmem>>, %arg17: memref<2x4x31xf32, #tpu.memory_space<vmem>>) attributes {dimension_semantics = [], scalar_prefetch = 0 : i64, scratch_operands = 0 : i64, tpu.core_type = #tpu.core_type<tc>} {
    %c0 = arith.constant 0 : index
    %c0_0 = arith.constant 0 : index
    %c0_1 = arith.constant 0 : index
    %0 = vector.load %arg0[%c0, %c0_0, %c0_1] : memref<2x32x8xf32, #tpu.memory_space<vmem>>, vector<1x32x8xf32>
    %1 = vector.shape_cast %0 : vector<1x32x8xf32> to vector<32x8xf32>
    %c1 = arith.constant 1 : index
    %c0_2 = arith.constant 0 : index
    %c0_3 = arith.constant 0 : index
    %2 = vector.load %arg0[%c1, %c0_2, %c0_3] : memref<2x32x8xf32, #tpu.memory_space<vmem>>, vector<1x32x8xf32>
    %3 = vector.shape_cast %2 : vector<1x32x8xf32> to vector<32x8xf32>
    %c0_4 = arith.constant 0 : index
    %c0_5 = arith.constant 0 : index
    %4 = vector.load %arg1[%c0_4, %c0_5] : memref<48x32xf32, #tpu.memory_space<vmem>>, vector<48x32xf32>
    %c0_6 = arith.constant 0 : index
    %c0_7 = arith.constant 0 : index
    %5 = vector.load %arg3[%c0_6, %c0_7] : memref<16x1xf32, #tpu.memory_space<vmem>>, vector<16x1xf32>
    %cst = arith.constant 0.000000e+00 : f32
    %6 = vector.broadcast %cst : f32 to vector<16x1xf32>
    %cst_8 = arith.constant dense<0.000000e+00> : vector<48x8xf32>
    %7 = tpu.matmul %4, %1, %cst_8 {dimension_numbers = #tpu.dot_dimension_numbers<[1], [0], [0], [1], [0, 0, 1, 1], [], []>} : vector<48x32xf32>, vector<32x8xf32>, vector<48x8xf32> -> vector<48x8xf32>
    %8 = vector.extract_strided_slice %7 {offsets = [0, 0], sizes = [16, 8], strides = [1, 1]} : vector<48x8xf32> to vector<16x8xf32>
    %9 = vector.extract_strided_slice %7 {offsets = [16, 0], sizes = [16, 8], strides = [1, 1]} : vector<48x8xf32> to vector<16x8xf32>
    %10 = vector.extract_strided_slice %7 {offsets = [32, 0], sizes = [16, 8], strides = [1, 1]} : vector<48x8xf32> to vector<16x8xf32>
    %11 = tpu.concatenate %8, %9, %10 in 1 : vector<16x8xf32>, vector<16x8xf32>, vector<16x8xf32> -> vector<16x24xf32>
    %c0_9 = arith.constant 0 : index
    %c0_10 = arith.constant 0 : index
    %12 = vector.load %arg2[%c0_9, %c0_10] : memref<24x16xf32, #tpu.memory_space<vmem>>, vector<24x16xf32>
    %cst_11 = arith.constant dense<0.000000e+00> : vector<16x16xf32>
    %13 = tpu.matmul %11, %12, %cst_11 {dimension_numbers = #tpu.dot_dimension_numbers<[1], [0], [0], [1], [0, 0, 1, 1], [], []>} : vector<16x24xf32>, vector<24x16xf32>, vector<16x16xf32> -> vector<16x16xf32>
    %14 = vector.broadcast %5 : vector<16x1xf32> to vector<16x16xf32>
    %15 = arith.addf %13, %14 : vector<16x16xf32>
    %cst_12 = arith.constant dense<0.000000e+00> : vector<16xf32>
    %16 = vector.multi_reduction <add>, %15, %cst_12 [1] : vector<16x16xf32> to vector<16xf32>
    %17 = vector.shape_cast %16 : vector<16xf32> to vector<16x1xf32>
    %18 = arith.addf %6, %17 : vector<16x1xf32>
    %cst_13 = arith.constant dense<0.000000e+00> : vector<48x8xf32>
    %19 = tpu.matmul %4, %3, %cst_13 {dimension_numbers = #tpu.dot_dimension_numbers<[1], [0], [0], [1], [0, 0, 1, 1], [], []>} : vector<48x32xf32>, vector<32x8xf32>, vector<48x8xf32> -> vector<48x8xf32>
    %20 = vector.extract_strided_slice %19 {offsets = [0, 0], sizes = [16, 8], strides = [1, 1]} : vector<48x8xf32> to vector<16x8xf32>
    %21 = vector.extract_strided_slice %19 {offsets = [16, 0], sizes = [16, 8], strides = [1, 1]} : vector<48x8xf32> to vector<16x8xf32>
    %22 = vector.extract_strided_slice %19 {offsets = [32, 0], sizes = [16, 8], strides = [1, 1]} : vector<48x8xf32> to vector<16x8xf32>
    %23 = tpu.concatenate %20, %21, %22 in 1 : vector<16x8xf32>, vector<16x8xf32>, vector<16x8xf32> -> vector<16x24xf32>
    %c0_14 = arith.constant 0 : index
    %c0_15 = arith.constant 0 : index
    %24 = vector.load %arg2[%c0_14, %c0_15] : memref<24x16xf32, #tpu.memory_space<vmem>>, vector<24x16xf32>
    %cst_16 = arith.constant dense<0.000000e+00> : vector<16x16xf32>
    %25 = tpu.matmul %23, %24, %cst_16 {dimension_numbers = #tpu.dot_dimension_numbers<[1], [0], [0], [1], [0, 0, 1, 1], [], []>} : vector<16x24xf32>, vector<24x16xf32>, vector<16x16xf32> -> vector<16x16xf32>
    %26 = vector.broadcast %5 : vector<16x1xf32> to vector<16x16xf32>
    %27 = arith.addf %25, %26 : vector<16x16xf32>
    %cst_17 = arith.constant dense<0.000000e+00> : vector<16xf32>
    %28 = vector.multi_reduction <add>, %27, %cst_17 [1] : vector<16x16xf32> to vector<16xf32>
    %29 = vector.shape_cast %28 : vector<16xf32> to vector<16x1xf32>
    %30 = arith.addf %18, %29 : vector<16x1xf32>
    %cst_18 = arith.constant 3.125000e-02 : f32
    %31 = vector.broadcast %cst_18 : f32 to vector<16x1xf32>
    %32 = arith.mulf %30, %31 : vector<16x1xf32>
    %cst_19 = arith.constant 0.000000e+00 : f32
    %33 = vector.broadcast %cst_19 : f32 to vector<16x1xf32>
    %34 = vector.broadcast %32 : vector<16x1xf32> to vector<16x16xf32>
    %35 = arith.subf %15, %34 : vector<16x16xf32>
    %36 = arith.mulf %35, %35 : vector<16x16xf32>
    %cst_20 = arith.constant dense<0.000000e+00> : vector<16xf32>
    %37 = vector.multi_reduction <add>, %36, %cst_20 [1] : vector<16x16xf32> to vector<16xf32>
    %38 = vector.shape_cast %37 : vector<16xf32> to vector<16x1xf32>
    %39 = arith.addf %33, %38 : vector<16x1xf32>
    %40 = vector.broadcast %32 : vector<16x1xf32> to vector<16x16xf32>
    %41 = arith.subf %27, %40 : vector<16x16xf32>
    %42 = arith.mulf %41, %41 : vector<16x16xf32>
    %cst_21 = arith.constant dense<0.000000e+00> : vector<16xf32>
    %43 = vector.multi_reduction <add>, %42, %cst_21 [1] : vector<16x16xf32> to vector<16xf32>
    %44 = vector.shape_cast %43 : vector<16xf32> to vector<16x1xf32>
    %45 = arith.addf %39, %44 : vector<16x1xf32>
    %cst_22 = arith.constant 3.125000e-02 : f32
    %46 = vector.broadcast %cst_22 : f32 to vector<16x1xf32>
    %47 = arith.mulf %45, %46 : vector<16x1xf32>
    %c0_23 = arith.constant 0 : index
    %c0_24 = arith.constant 0 : index
    %48 = vector.load %arg4[%c0_23, %c0_24] : memref<16x1xf32, #tpu.memory_space<vmem>>, vector<16x1xf32>
    %cst_25 = arith.constant 9.99999974E-6 : f32
    %49 = vector.broadcast %cst_25 : f32 to vector<16x1xf32>
    %50 = arith.addf %47, %49 : vector<16x1xf32>
    %51 = math.rsqrt %50 : vector<16x1xf32>
    %52 = arith.mulf %48, %51 : vector<16x1xf32>
    %c0_26 = arith.constant 0 : index
    %c0_27 = arith.constant 0 : index
    %53 = vector.load %arg5[%c0_26, %c0_27] : memref<16x1xf32, #tpu.memory_space<vmem>>, vector<16x1xf32>
    %54 = arith.mulf %32, %52 : vector<16x1xf32>
    %55 = arith.subf %53, %54 : vector<16x1xf32>
    %56 = vector.broadcast %52 : vector<16x1xf32> to vector<16x16xf32>
    %57 = arith.mulf %15, %56 : vector<16x16xf32>
    %58 = vector.broadcast %55 : vector<16x1xf32> to vector<16x16xf32>
    %59 = arith.addf %57, %58 : vector<16x16xf32>
    %cst_28 = arith.constant 0.000000e+00 : f32
    %60 = vector.broadcast %cst_28 : f32 to vector<16x16xf32>
    %61 = arith.maximumf %59, %60 : vector<16x16xf32>
    %62 = vector.broadcast %52 : vector<16x1xf32> to vector<16x16xf32>
    %63 = arith.mulf %27, %62 : vector<16x16xf32>
    %64 = vector.broadcast %55 : vector<16x1xf32> to vector<16x16xf32>
    %65 = arith.addf %63, %64 : vector<16x16xf32>
    %cst_29 = arith.constant 0.000000e+00 : f32
    %66 = vector.broadcast %cst_29 : f32 to vector<16x16xf32>
    %67 = arith.maximumf %65, %66 : vector<16x16xf32>
    %c0_30 = arith.constant 0 : index
    %c0_31 = arith.constant 0 : index
    %68 = vector.load %arg6[%c0_30, %c0_31] : memref<24x16xf32, #tpu.memory_space<vmem>>, vector<24x16xf32>
    %c0_32 = arith.constant 0 : index
    %c0_33 = arith.constant 0 : index
    %69 = vector.load %arg8[%c0_32, %c0_33] : memref<8x1xf32, #tpu.memory_space<vmem>>, vector<8x1xf32>
    %cst_34 = arith.constant 0.000000e+00 : f32
    %70 = vector.broadcast %cst_34 : f32 to vector<8x1xf32>
    %cst_35 = arith.constant dense<0.000000e+00> : vector<24x16xf32>
    %71 = tpu.matmul %68, %61, %cst_35 {dimension_numbers = #tpu.dot_dimension_numbers<[1], [0], [0], [1], [0, 0, 1, 1], [], []>} : vector<24x16xf32>, vector<16x16xf32>, vector<24x16xf32> -> vector<24x16xf32>
    %72 = vector.extract_strided_slice %71 {offsets = [0, 0], sizes = [8, 16], strides = [1, 1]} : vector<24x16xf32> to vector<8x16xf32>
    %73 = vector.extract_strided_slice %71 {offsets = [8, 0], sizes = [8, 16], strides = [1, 1]} : vector<24x16xf32> to vector<8x16xf32>
    %74 = vector.extract_strided_slice %71 {offsets = [16, 0], sizes = [8, 16], strides = [1, 1]} : vector<24x16xf32> to vector<8x16xf32>
    %75 = tpu.concatenate %72, %73, %74 in 1 : vector<8x16xf32>, vector<8x16xf32>, vector<8x16xf32> -> vector<8x48xf32>
    %c0_36 = arith.constant 0 : index
    %c0_37 = arith.constant 0 : index
    %76 = vector.load %arg7[%c0_36, %c0_37] : memref<48x32xf32, #tpu.memory_space<vmem>>, vector<48x32xf32>
    %cst_38 = arith.constant dense<0.000000e+00> : vector<8x32xf32>
    %77 = tpu.matmul %75, %76, %cst_38 {dimension_numbers = #tpu.dot_dimension_numbers<[1], [0], [0], [1], [0, 0, 1, 1], [], []>} : vector<8x48xf32>, vector<48x32xf32>, vector<8x32xf32> -> vector<8x32xf32>
    %78 = vector.broadcast %69 : vector<8x1xf32> to vector<8x32xf32>
    %79 = arith.addf %77, %78 : vector<8x32xf32>
    %cst_39 = arith.constant dense<0.000000e+00> : vector<8xf32>
    %80 = vector.multi_reduction <add>, %79, %cst_39 [1] : vector<8x32xf32> to vector<8xf32>
    %81 = vector.shape_cast %80 : vector<8xf32> to vector<8x1xf32>
    %82 = arith.addf %70, %81 : vector<8x1xf32>
    %cst_40 = arith.constant dense<0.000000e+00> : vector<24x16xf32>
    %83 = tpu.matmul %68, %67, %cst_40 {dimension_numbers = #tpu.dot_dimension_numbers<[1], [0], [0], [1], [0, 0, 1, 1], [], []>} : vector<24x16xf32>, vector<16x16xf32>, vector<24x16xf32> -> vector<24x16xf32>
    %84 = vector.extract_strided_slice %83 {offsets = [0, 0], sizes = [8, 16], strides = [1, 1]} : vector<24x16xf32> to vector<8x16xf32>
    %85 = vector.extract_strided_slice %83 {offsets = [8, 0], sizes = [8, 16], strides = [1, 1]} : vector<24x16xf32> to vector<8x16xf32>
    %86 = vector.extract_strided_slice %83 {offsets = [16, 0], sizes = [8, 16], strides = [1, 1]} : vector<24x16xf32> to vector<8x16xf32>
    %87 = tpu.concatenate %84, %85, %86 in 1 : vector<8x16xf32>, vector<8x16xf32>, vector<8x16xf32> -> vector<8x48xf32>
    %c0_41 = arith.constant 0 : index
    %c0_42 = arith.constant 0 : index
    %88 = vector.load %arg7[%c0_41, %c0_42] : memref<48x32xf32, #tpu.memory_space<vmem>>, vector<48x32xf32>
    %cst_43 = arith.constant dense<0.000000e+00> : vector<8x32xf32>
    %89 = tpu.matmul %87, %88, %cst_43 {dimension_numbers = #tpu.dot_dimension_numbers<[1], [0], [0], [1], [0, 0, 1, 1], [], []>} : vector<8x48xf32>, vector<48x32xf32>, vector<8x32xf32> -> vector<8x32xf32>
    %90 = vector.broadcast %69 : vector<8x1xf32> to vector<8x32xf32>
    %91 = arith.addf %89, %90 : vector<8x32xf32>
    %cst_44 = arith.constant dense<0.000000e+00> : vector<8xf32>
    %92 = vector.multi_reduction <add>, %91, %cst_44 [1] : vector<8x32xf32> to vector<8xf32>
    %93 = vector.shape_cast %92 : vector<8xf32> to vector<8x1xf32>
    %94 = arith.addf %82, %93 : vector<8x1xf32>
    %cst_45 = arith.constant 1.562500e-02 : f32
    %95 = vector.broadcast %cst_45 : f32 to vector<8x1xf32>
    %96 = arith.mulf %94, %95 : vector<8x1xf32>
    %cst_46 = arith.constant 0.000000e+00 : f32
    %97 = vector.broadcast %cst_46 : f32 to vector<8x1xf32>
    %98 = vector.broadcast %96 : vector<8x1xf32> to vector<8x32xf32>
    %99 = arith.subf %79, %98 : vector<8x32xf32>
    %100 = arith.mulf %99, %99 : vector<8x32xf32>
    %cst_47 = arith.constant dense<0.000000e+00> : vector<8xf32>
    %101 = vector.multi_reduction <add>, %100, %cst_47 [1] : vector<8x32xf32> to vector<8xf32>
    %102 = vector.shape_cast %101 : vector<8xf32> to vector<8x1xf32>
    %103 = arith.addf %97, %102 : vector<8x1xf32>
    %104 = vector.broadcast %96 : vector<8x1xf32> to vector<8x32xf32>
    %105 = arith.subf %91, %104 : vector<8x32xf32>
    %106 = arith.mulf %105, %105 : vector<8x32xf32>
    %cst_48 = arith.constant dense<0.000000e+00> : vector<8xf32>
    %107 = vector.multi_reduction <add>, %106, %cst_48 [1] : vector<8x32xf32> to vector<8xf32>
    %108 = vector.shape_cast %107 : vector<8xf32> to vector<8x1xf32>
    %109 = arith.addf %103, %108 : vector<8x1xf32>
    %cst_49 = arith.constant 1.562500e-02 : f32
    %110 = vector.broadcast %cst_49 : f32 to vector<8x1xf32>
    %111 = arith.mulf %109, %110 : vector<8x1xf32>
    %c0_50 = arith.constant 0 : index
    %c0_51 = arith.constant 0 : index
    %112 = vector.load %arg9[%c0_50, %c0_51] : memref<8x1xf32, #tpu.memory_space<vmem>>, vector<8x1xf32>
    %cst_52 = arith.constant 9.99999974E-6 : f32
    %113 = vector.broadcast %cst_52 : f32 to vector<8x1xf32>
    %114 = arith.addf %111, %113 : vector<8x1xf32>
    %115 = math.rsqrt %114 : vector<8x1xf32>
    %116 = arith.mulf %112, %115 : vector<8x1xf32>
    %c0_53 = arith.constant 0 : index
    %c0_54 = arith.constant 0 : index
    %117 = vector.load %arg10[%c0_53, %c0_54] : memref<8x1xf32, #tpu.memory_space<vmem>>, vector<8x1xf32>
    %118 = arith.mulf %96, %116 : vector<8x1xf32>
    %119 = arith.subf %117, %118 : vector<8x1xf32>
    %120 = vector.broadcast %116 : vector<8x1xf32> to vector<8x32xf32>
    %121 = arith.mulf %79, %120 : vector<8x32xf32>
    %122 = vector.broadcast %119 : vector<8x1xf32> to vector<8x32xf32>
    %123 = arith.addf %121, %122 : vector<8x32xf32>
    %cst_55 = arith.constant 0.000000e+00 : f32
    %124 = vector.broadcast %cst_55 : f32 to vector<8x32xf32>
    %125 = arith.maximumf %123, %124 : vector<8x32xf32>
    %126 = vector.broadcast %116 : vector<8x1xf32> to vector<8x32xf32>
    %127 = arith.mulf %91, %126 : vector<8x32xf32>
    %128 = vector.broadcast %119 : vector<8x1xf32> to vector<8x32xf32>
    %129 = arith.addf %127, %128 : vector<8x32xf32>
    %cst_56 = arith.constant 0.000000e+00 : f32
    %130 = vector.broadcast %cst_56 : f32 to vector<8x32xf32>
    %131 = arith.maximumf %129, %130 : vector<8x32xf32>
    %c0_57 = arith.constant 0 : index
    %c0_58 = arith.constant 0 : index
    %132 = vector.load %arg11[%c0_57, %c0_58] : memref<24x8xf32, #tpu.memory_space<vmem>>, vector<24x8xf32>
    %c0_59 = arith.constant 0 : index
    %c0_60 = arith.constant 0 : index
    %133 = vector.load %arg12[%c0_59, %c0_60] : memref<8x1xf32, #tpu.memory_space<vmem>>, vector<8x1xf32>
    %134 = tpu.iota {dimensions = array<i32: 1>} : vector<8x32xi32>
    %cst_61 = arith.constant 0.000000e+00 : f32
    %135 = vector.broadcast %cst_61 : f32 to vector<8x1xf32>
    %cst_62 = arith.constant dense<0.000000e+00> : vector<24x32xf32>
    %136 = tpu.matmul %132, %125, %cst_62 {dimension_numbers = #tpu.dot_dimension_numbers<[1], [0], [0], [1], [0, 0, 1, 1], [], []>} : vector<24x8xf32>, vector<8x32xf32>, vector<24x32xf32> -> vector<24x32xf32>
    %cst_63 = arith.constant 0.000000e+00 : f32
    %137 = vector.broadcast %cst_63 : f32 to vector<8x32xf32>
    %138 = vector.extract_strided_slice %136 {offsets = [0, 0], sizes = [8, 32], strides = [1, 1]} : vector<24x32xf32> to vector<8x32xf32>
    %c31_i32 = arith.constant 31 : i32
    %139 = tpu.dynamic_rotate %138 by %c31_i32 dim 1 : vector<8x32xf32>, i32 -> vector<8x32xf32>
    %c-1_i32 = arith.constant -1 : i32
    %140 = vector.broadcast %c-1_i32 : i32 to vector<8x32xi32>
    %141 = arith.cmpi sge, %134, %140 : vector<8x32xi32>
    %c31_i32_64 = arith.constant 31 : i32
    %142 = vector.broadcast %c31_i32_64 : i32 to vector<8x32xi32>
    %143 = arith.cmpi slt, %134, %142 : vector<8x32xi32>
    %144 = arith.andi %141, %143 : vector<8x32xi1>
    %cst_65 = arith.constant 0.000000e+00 : f32
    %145 = vector.broadcast %cst_65 : f32 to vector<8x32xf32>
    %146 = arith.select %144, %139, %145 : vector<8x32xi1>, vector<8x32xf32>
    %147 = arith.addf %137, %146 : vector<8x32xf32>
    %148 = vector.extract_strided_slice %136 {offsets = [8, 0], sizes = [8, 32], strides = [1, 1]} : vector<24x32xf32> to vector<8x32xf32>
    %149 = arith.addf %147, %148 : vector<8x32xf32>
    %150 = vector.extract_strided_slice %136 {offsets = [16, 0], sizes = [8, 32], strides = [1, 1]} : vector<24x32xf32> to vector<8x32xf32>
    %c1_i32 = arith.constant 1 : i32
    %151 = tpu.dynamic_rotate %150 by %c1_i32 dim 1 : vector<8x32xf32>, i32 -> vector<8x32xf32>
    %c1_i32_66 = arith.constant 1 : i32
    %152 = vector.broadcast %c1_i32_66 : i32 to vector<8x32xi32>
    %153 = arith.cmpi sge, %134, %152 : vector<8x32xi32>
    %c33_i32 = arith.constant 33 : i32
    %154 = vector.broadcast %c33_i32 : i32 to vector<8x32xi32>
    %155 = arith.cmpi slt, %134, %154 : vector<8x32xi32>
    %156 = arith.andi %153, %155 : vector<8x32xi1>
    %cst_67 = arith.constant 0.000000e+00 : f32
    %157 = vector.broadcast %cst_67 : f32 to vector<8x32xf32>
    %158 = arith.select %156, %151, %157 : vector<8x32xi1>, vector<8x32xf32>
    %159 = arith.addf %149, %158 : vector<8x32xf32>
    %160 = vector.broadcast %133 : vector<8x1xf32> to vector<8x32xf32>
    %161 = arith.addf %159, %160 : vector<8x32xf32>
    %cst_68 = arith.constant dense<0.000000e+00> : vector<8xf32>
    %162 = vector.multi_reduction <add>, %161, %cst_68 [1] : vector<8x32xf32> to vector<8xf32>
    %163 = vector.shape_cast %162 : vector<8xf32> to vector<8x1xf32>
    %164 = arith.addf %135, %163 : vector<8x1xf32>
    %cst_69 = arith.constant dense<0.000000e+00> : vector<24x32xf32>
    %165 = tpu.matmul %132, %131, %cst_69 {dimension_numbers = #tpu.dot_dimension_numbers<[1], [0], [0], [1], [0, 0, 1, 1], [], []>} : vector<24x8xf32>, vector<8x32xf32>, vector<24x32xf32> -> vector<24x32xf32>
    %cst_70 = arith.constant 0.000000e+00 : f32
    %166 = vector.broadcast %cst_70 : f32 to vector<8x32xf32>
    %167 = vector.extract_strided_slice %165 {offsets = [0, 0], sizes = [8, 32], strides = [1, 1]} : vector<24x32xf32> to vector<8x32xf32>
    %c31_i32_71 = arith.constant 31 : i32
    %168 = tpu.dynamic_rotate %167 by %c31_i32_71 dim 1 : vector<8x32xf32>, i32 -> vector<8x32xf32>
    %c-1_i32_72 = arith.constant -1 : i32
    %169 = vector.broadcast %c-1_i32_72 : i32 to vector<8x32xi32>
    %170 = arith.cmpi sge, %134, %169 : vector<8x32xi32>
    %c31_i32_73 = arith.constant 31 : i32
    %171 = vector.broadcast %c31_i32_73 : i32 to vector<8x32xi32>
    %172 = arith.cmpi slt, %134, %171 : vector<8x32xi32>
    %173 = arith.andi %170, %172 : vector<8x32xi1>
    %cst_74 = arith.constant 0.000000e+00 : f32
    %174 = vector.broadcast %cst_74 : f32 to vector<8x32xf32>
    %175 = arith.select %173, %168, %174 : vector<8x32xi1>, vector<8x32xf32>
    %176 = arith.addf %166, %175 : vector<8x32xf32>
    %177 = vector.extract_strided_slice %165 {offsets = [8, 0], sizes = [8, 32], strides = [1, 1]} : vector<24x32xf32> to vector<8x32xf32>
    %178 = arith.addf %176, %177 : vector<8x32xf32>
    %179 = vector.extract_strided_slice %165 {offsets = [16, 0], sizes = [8, 32], strides = [1, 1]} : vector<24x32xf32> to vector<8x32xf32>
    %c1_i32_75 = arith.constant 1 : i32
    %180 = tpu.dynamic_rotate %179 by %c1_i32_75 dim 1 : vector<8x32xf32>, i32 -> vector<8x32xf32>
    %c1_i32_76 = arith.constant 1 : i32
    %181 = vector.broadcast %c1_i32_76 : i32 to vector<8x32xi32>
    %182 = arith.cmpi sge, %134, %181 : vector<8x32xi32>
    %c33_i32_77 = arith.constant 33 : i32
    %183 = vector.broadcast %c33_i32_77 : i32 to vector<8x32xi32>
    %184 = arith.cmpi slt, %134, %183 : vector<8x32xi32>
    %185 = arith.andi %182, %184 : vector<8x32xi1>
    %cst_78 = arith.constant 0.000000e+00 : f32
    %186 = vector.broadcast %cst_78 : f32 to vector<8x32xf32>
    %187 = arith.select %185, %180, %186 : vector<8x32xi1>, vector<8x32xf32>
    %188 = arith.addf %178, %187 : vector<8x32xf32>
    %189 = vector.broadcast %133 : vector<8x1xf32> to vector<8x32xf32>
    %190 = arith.addf %188, %189 : vector<8x32xf32>
    %cst_79 = arith.constant dense<0.000000e+00> : vector<8xf32>
    %191 = vector.multi_reduction <add>, %190, %cst_79 [1] : vector<8x32xf32> to vector<8xf32>
    %192 = vector.shape_cast %191 : vector<8xf32> to vector<8x1xf32>
    %193 = arith.addf %164, %192 : vector<8x1xf32>
    %cst_80 = arith.constant 1.562500e-02 : f32
    %194 = vector.broadcast %cst_80 : f32 to vector<8x1xf32>
    %195 = arith.mulf %193, %194 : vector<8x1xf32>
    %cst_81 = arith.constant 0.000000e+00 : f32
    %196 = vector.broadcast %cst_81 : f32 to vector<8x1xf32>
    %197 = vector.broadcast %195 : vector<8x1xf32> to vector<8x32xf32>
    %198 = arith.subf %161, %197 : vector<8x32xf32>
    %199 = arith.mulf %198, %198 : vector<8x32xf32>
    %cst_82 = arith.constant dense<0.000000e+00> : vector<8xf32>
    %200 = vector.multi_reduction <add>, %199, %cst_82 [1] : vector<8x32xf32> to vector<8xf32>
    %201 = vector.shape_cast %200 : vector<8xf32> to vector<8x1xf32>
    %202 = arith.addf %196, %201 : vector<8x1xf32>
    %203 = vector.broadcast %195 : vector<8x1xf32> to vector<8x32xf32>
    %204 = arith.subf %190, %203 : vector<8x32xf32>
    %205 = arith.mulf %204, %204 : vector<8x32xf32>
    %cst_83 = arith.constant dense<0.000000e+00> : vector<8xf32>
    %206 = vector.multi_reduction <add>, %205, %cst_83 [1] : vector<8x32xf32> to vector<8xf32>
    %207 = vector.shape_cast %206 : vector<8xf32> to vector<8x1xf32>
    %208 = arith.addf %202, %207 : vector<8x1xf32>
    %cst_84 = arith.constant 1.562500e-02 : f32
    %209 = vector.broadcast %cst_84 : f32 to vector<8x1xf32>
    %210 = arith.mulf %208, %209 : vector<8x1xf32>
    %c0_85 = arith.constant 0 : index
    %c0_86 = arith.constant 0 : index
    %211 = vector.load %arg13[%c0_85, %c0_86] : memref<8x1xf32, #tpu.memory_space<vmem>>, vector<8x1xf32>
    %cst_87 = arith.constant 9.99999974E-6 : f32
    %212 = vector.broadcast %cst_87 : f32 to vector<8x1xf32>
    %213 = arith.addf %210, %212 : vector<8x1xf32>
    %214 = math.rsqrt %213 : vector<8x1xf32>
    %215 = arith.mulf %211, %214 : vector<8x1xf32>
    %c0_88 = arith.constant 0 : index
    %c0_89 = arith.constant 0 : index
    %216 = vector.load %arg14[%c0_88, %c0_89] : memref<8x1xf32, #tpu.memory_space<vmem>>, vector<8x1xf32>
    %217 = arith.mulf %195, %215 : vector<8x1xf32>
    %218 = arith.subf %216, %217 : vector<8x1xf32>
    %219 = vector.broadcast %215 : vector<8x1xf32> to vector<8x32xf32>
    %220 = arith.mulf %161, %219 : vector<8x32xf32>
    %221 = vector.broadcast %218 : vector<8x1xf32> to vector<8x32xf32>
    %222 = arith.addf %220, %221 : vector<8x32xf32>
    %cst_90 = arith.constant 0.000000e+00 : f32
    %223 = vector.broadcast %cst_90 : f32 to vector<8x32xf32>
    %224 = arith.maximumf %222, %223 : vector<8x32xf32>
    %225 = vector.broadcast %215 : vector<8x1xf32> to vector<8x32xf32>
    %226 = arith.mulf %190, %225 : vector<8x32xf32>
    %227 = vector.broadcast %218 : vector<8x1xf32> to vector<8x32xf32>
    %228 = arith.addf %226, %227 : vector<8x32xf32>
    %cst_91 = arith.constant 0.000000e+00 : f32
    %229 = vector.broadcast %cst_91 : f32 to vector<8x32xf32>
    %230 = arith.maximumf %228, %229 : vector<8x32xf32>
    %c0_92 = arith.constant 0 : index
    %c0_93 = arith.constant 0 : index
    %231 = vector.load %arg15[%c0_92, %c0_93] : memref<16x8xf32, #tpu.memory_space<vmem>>, vector<16x8xf32>
    %c0_94 = arith.constant 0 : index
    %c0_95 = arith.constant 0 : index
    %232 = vector.load %arg16[%c0_94, %c0_95] : memref<8x1xf32, #tpu.memory_space<vmem>>, vector<8x1xf32>
    %233 = tpu.iota {dimensions = array<i32: 1>} : vector<8x32xi32>
    %cst_96 = arith.constant dense<0.000000e+00> : vector<16x32xf32>
    %234 = tpu.matmul %231, %224, %cst_96 {dimension_numbers = #tpu.dot_dimension_numbers<[1], [0], [0], [1], [0, 0, 1, 1], [], []>} : vector<16x8xf32>, vector<8x32xf32>, vector<16x32xf32> -> vector<16x32xf32>
    %cst_97 = arith.constant 0.000000e+00 : f32
    %235 = vector.broadcast %cst_97 : f32 to vector<8x32xf32>
    %236 = vector.extract_strided_slice %234 {offsets = [0, 0], sizes = [8, 32], strides = [1, 1]} : vector<16x32xf32> to vector<8x32xf32>
    %237 = arith.addf %235, %236 : vector<8x32xf32>
    %238 = vector.extract_strided_slice %234 {offsets = [8, 0], sizes = [8, 32], strides = [1, 1]} : vector<16x32xf32> to vector<8x32xf32>
    %c31_i32_98 = arith.constant 31 : i32
    %239 = tpu.dynamic_rotate %238 by %c31_i32_98 dim 1 : vector<8x32xf32>, i32 -> vector<8x32xf32>
    %c-1_i32_99 = arith.constant -1 : i32
    %240 = vector.broadcast %c-1_i32_99 : i32 to vector<8x32xi32>
    %241 = arith.cmpi sge, %233, %240 : vector<8x32xi32>
    %c31_i32_100 = arith.constant 31 : i32
    %242 = vector.broadcast %c31_i32_100 : i32 to vector<8x32xi32>
    %243 = arith.cmpi slt, %233, %242 : vector<8x32xi32>
    %244 = arith.andi %241, %243 : vector<8x32xi1>
    %cst_101 = arith.constant 0.000000e+00 : f32
    %245 = vector.broadcast %cst_101 : f32 to vector<8x32xf32>
    %246 = arith.select %244, %239, %245 : vector<8x32xi1>, vector<8x32xf32>
    %247 = arith.addf %237, %246 : vector<8x32xf32>
    %248 = vector.broadcast %232 : vector<8x1xf32> to vector<8x32xf32>
    %249 = arith.addf %247, %248 : vector<8x32xf32>
    %250 = math.tanh %249 : vector<8x32xf32>
    %251 = vector.extract_strided_slice %250 {offsets = [0, 0], sizes = [4, 31], strides = [1, 1]} : vector<8x32xf32> to vector<4x31xf32>
    %c0_102 = arith.constant 0 : index
    %c0_103 = arith.constant 0 : index
    %c0_104 = arith.constant 0 : index
    %252 = vector.load %arg17[%c0_102, %c0_103, %c0_104] : memref<2x4x31xf32, #tpu.memory_space<vmem>>, vector<1x4x31xf32>
    %253 = vector.shape_cast %252 : vector<1x4x31xf32> to vector<4x31xf32>
    %254 = vector.shape_cast %251 : vector<4x31xf32> to vector<1x4x31xf32>
    tpu.vector_store %arg17[%c0_102, %c0_103, %c0_104], %254 {strides = array<i32>} : memref<2x4x31xf32, #tpu.memory_space<vmem>>, vector<1x4x31xf32>,
    %cst_105 = arith.constant dense<0.000000e+00> : vector<16x32xf32>
    %255 = tpu.matmul %231, %230, %cst_105 {dimension_numbers = #tpu.dot_dimension_numbers<[1], [0], [0], [1], [0, 0, 1, 1], [], []>} : vector<16x8xf32>, vector<8x32xf32>, vector<16x32xf32> -> vector<16x32xf32>
    %cst_106 = arith.constant 0.000000e+00 : f32
    %256 = vector.broadcast %cst_106 : f32 to vector<8x32xf32>
    %257 = vector.extract_strided_slice %255 {offsets = [0, 0], sizes = [8, 32], strides = [1, 1]} : vector<16x32xf32> to vector<8x32xf32>
    %258 = arith.addf %256, %257 : vector<8x32xf32>
    %259 = vector.extract_strided_slice %255 {offsets = [8, 0], sizes = [8, 32], strides = [1, 1]} : vector<16x32xf32> to vector<8x32xf32>
    %c31_i32_107 = arith.constant 31 : i32
    %260 = tpu.dynamic_rotate %259 by %c31_i32_107 dim 1 : vector<8x32xf32>, i32 -> vector<8x32xf32>
    %c-1_i32_108 = arith.constant -1 : i32
    %261 = vector.broadcast %c-1_i32_108 : i32 to vector<8x32xi32>
    %262 = arith.cmpi sge, %233, %261 : vector<8x32xi32>
    %c31_i32_109 = arith.constant 31 : i32
    %263 = vector.broadcast %c31_i32_109 : i32 to vector<8x32xi32>
    %264 = arith.cmpi slt, %233, %263 : vector<8x32xi32>
    %265 = arith.andi %262, %264 : vector<8x32xi1>
    %cst_110 = arith.constant 0.000000e+00 : f32
    %266 = vector.broadcast %cst_110 : f32 to vector<8x32xf32>
    %267 = arith.select %265, %260, %266 : vector<8x32xi1>, vector<8x32xf32>
    %268 = arith.addf %258, %267 : vector<8x32xf32>
    %269 = vector.broadcast %232 : vector<8x1xf32> to vector<8x32xf32>
    %270 = arith.addf %268, %269 : vector<8x32xf32>
    %271 = math.tanh %270 : vector<8x32xf32>
    %272 = vector.extract_strided_slice %271 {offsets = [0, 0], sizes = [4, 31], strides = [1, 1]} : vector<8x32xf32> to vector<4x31xf32>
    %c1_111 = arith.constant 1 : index
    %c0_112 = arith.constant 0 : index
    %c0_113 = arith.constant 0 : index
    %273 = vector.load %arg17[%c1_111, %c0_112, %c0_113] : memref<2x4x31xf32, #tpu.memory_space<vmem>>, vector<1x4x31xf32>
    %274 = vector.shape_cast %273 : vector<1x4x31xf32> to vector<4x31xf32>
    %275 = vector.shape_cast %272 : vector<4x31xf32> to vector<1x4x31xf32>
    tpu.vector_store %arg17[%c1_111, %c0_112, %c0_113], %275 {strides = array<i32>} : memref<2x4x31xf32, #tpu.memory_space<vmem>>, vector<1x4x31xf32>,
    return
  }
}

</mosaic_0001>

<llo_original>
// kernel: _lambda_.1
$region0: #{_lambda_.1}
  #allocation0 [shape = 'u32[]', space=smem, size = 0x4, offset = 0x4, fixed_abs, tag = 'smem constant byte address 0x4 - core index']
  #allocation1 [shape = 'u32[72,128]{1,0:T(1,128)}', space=vmem, size = 0x9000, scoped, tag = 'internal scratch']
  %s0 = inlined_call_operand.vmem [shape: f32[2,32,8], index: 0, kind: input, shape index: {}]
  %s1 = inlined_call_operand.vmem [shape: f32[48,32], index: 1, kind: input, shape index: {}]
  %s2 = inlined_call_operand.vmem [shape: f32[24,16], index: 2, kind: input, shape index: {}]
  %s3 = inlined_call_operand.vmem [shape: f32[16,1], index: 3, kind: input, shape index: {}]
  %s4 = inlined_call_operand.vmem [shape: f32[16,1], index: 4, kind: input, shape index: {}]
  %s5 = inlined_call_operand.vmem [shape: f32[16,1], index: 5, kind: input, shape index: {}]
  %s6 = inlined_call_operand.vmem [shape: f32[24,16], index: 6, kind: input, shape index: {}]
  %s7 = inlined_call_operand.vmem [shape: f32[48,32], index: 7, kind: input, shape index: {}]
  %s8 = inlined_call_operand.vmem [shape: f32[8,1], index: 8, kind: input, shape index: {}]
  %s9 = inlined_call_operand.vmem [shape: f32[8,1], index: 9, kind: input, shape index: {}]
  %s10 = inlined_call_operand.vmem [shape: f32[8,1], index: 10, kind: input, shape index: {}]
  %s11 = inlined_call_operand.vmem [shape: f32[24,8], index: 11, kind: input, shape index: {}]
  %s12 = inlined_call_operand.vmem [shape: f32[8,1], index: 12, kind: input, shape index: {}]
  %s13 = inlined_call_operand.vmem [shape: f32[8,1], index: 13, kind: input, shape index: {}]
  %s14 = inlined_call_operand.vmem [shape: f32[8,1], index: 14, kind: input, shape index: {}]
  %s15 = inlined_call_operand.vmem [shape: f32[16,8], index: 15, kind: input, shape index: {}]
  %s16 = inlined_call_operand.vmem [shape: f32[8,1], index: 16, kind: input, shape index: {}]
  %s17 = inlined_call_operand.hbm [shape: f32[2,4,31], index: 17, kind: output, shape index: {}]
  %s18 = sld [smem:[#allocation0]]
  $region78: #{_lambda_.1} parent=0
    _
  %s20 = ssub.s32 1, %s18
  %s21 = scalar_select 0, %s20, %s18
  $region1: #{_lambda_.1} parent=0
    #allocation2 [shape = 'u8[4096]{0}', space=vmem, size = 0x1000, scoped, tag = 'output window, operand 0, single buffered']
    #allocation3 [shape = 's32[1]{0}', space=sflag, size = 0x4, scoped, tag = 'scoped memory for _lambda_.1']
    %22 = vsyncpa [#allocation3], 0
    // Predicated region
    $region2: #{_lambda_.1} parent=1 // pred_check
      _
    $region3: #{_lambda_.1} parent=1 // pred_check_branch
      %24 = sbr.rel (0) target = $region5
    $region4: #{_lambda_.1} parent=1 // pred_region
      _
    $region5: #{_lambda_.1} parent=1 // pred_fallthru
      _
    // Predicated region
    $region6: #{_lambda_.1} parent=1 // pred_check
      _
    $region7: #{_lambda_.1} parent=1 // pred_check_branch
      %26 = sbr.rel (0) target = $region9
    $region8: #{_lambda_.1} parent=1 // pred_region
      _
    $region9: #{_lambda_.1} parent=1 // pred_fallthru
      _
    // Predicated region
    $region10: #{_lambda_.1} parent=1 // pred_check
      _
    $region11: #{_lambda_.1} parent=1 // pred_check_branch
      %28 = sbr.rel (0) target = $region13
    $region12: #{_lambda_.1} parent=1 // pred_region
      _
    $region13: #{_lambda_.1} parent=1 // pred_fallthru
      _
    // Predicated region
    $region14: #{_lambda_.1} parent=1 // pred_check
      _
    $region15: #{_lambda_.1} parent=1 // pred_check_branch
      %30 = sbr.rel (0) target = $region17
    $region16: #{_lambda_.1} parent=1 // pred_region
      _
    $region17: #{_lambda_.1} parent=1 // pred_fallthru
      _
    // Predicated region
    $region18: #{_lambda_.1} parent=1 // pred_check
      _
    $region19: #{_lambda_.1} parent=1 // pred_check_branch
      %32 = sbr.rel (0) target = $region21
    $region20: #{_lambda_.1} parent=1 // pred_region
      _
    $region21: #{_lambda_.1} parent=1 // pred_fallthru
      _
    // Predicated region
    $region22: #{_lambda_.1} parent=1 // pred_check
      _
    $region23: #{_lambda_.1} parent=1 // pred_check_branch
      %34 = sbr.rel (0) target = $region25
    $region24: #{_lambda_.1} parent=1 // pred_region
      _
    $region25: #{_lambda_.1} parent=1 // pred_fallthru
      _
    // Predicated region
    $region26: #{_lambda_.1} parent=1 // pred_check
      _
    $region27: #{_lambda_.1} parent=1 // pred_check_branch
      %36 = sbr.rel (0) target = $region29
    $region28: #{_lambda_.1} parent=1 // pred_region
      _
    $region29: #{_lambda_.1} parent=1 // pred_fallthru
      _
    // Predicated region
    $region30: #{_lambda_.1} parent=1 // pred_check
      _
    $region31: #{_lambda_.1} parent=1 // pred_check_branch
      %38 = sbr.rel (0) target = $region33
    $region32: #{_lambda_.1} parent=1 // pred_region
      _
    $region33: #{_lambda_.1} parent=1 // pred_fallthru
      _
    // Predicated region
    $region34: #{_lambda_.1} parent=1 // pred_check
      _
    $region35: #{_lambda_.1} parent=1 // pred_check_branch
      %40 = sbr.rel (0) target = $region37
    $region36: #{_lambda_.1} parent=1 // pred_region
      _
    $region37: #{_lambda_.1} parent=1 // pred_fallthru
      _
    // Predicated region
    $region38: #{_lambda_.1} parent=1 // pred_check
      _
    $region39: #{_lambda_.1} parent=1 // pred_check_branch
      %42 = sbr.rel (0) target = $region41
    $region40: #{_lambda_.1} parent=1 // pred_region
      _
    $region41: #{_lambda_.1} parent=1 // pred_fallthru
      _
    // Predicated region
    $region42: #{_lambda_.1} parent=1 // pred_check
      _
    $region43: #{_lambda_.1} parent=1 // pred_check_branch
      %44 = sbr.rel (0) target = $region45
    $region44: #{_lambda_.1} parent=1 // pred_region
      _
    $region45: #{_lambda_.1} parent=1 // pred_fallthru
      _
    // Predicated region
    $region46: #{_lambda_.1} parent=1 // pred_check
      _
    $region47: #{_lambda_.1} parent=1 // pred_check_branch
      %46 = sbr.rel (0) target = $region49
    $region48: #{_lambda_.1} parent=1 // pred_region
      _
    $region49: #{_lambda_.1} parent=1 // pred_fallthru
      _
    // Predicated region
    $region50: #{_lambda_.1} parent=1 // pred_check
      _
    $region51: #{_lambda_.1} parent=1 // pred_check_branch
      %48 = sbr.rel (0) target = $region53
    $region52: #{_lambda_.1} parent=1 // pred_region
      _
    $region53: #{_lambda_.1} parent=1 // pred_fallthru
      _
    // Predicated region
    $region54: #{_lambda_.1} parent=1 // pred_check
      _
    $region55: #{_lambda_.1} parent=1 // pred_check_branch
      %50 = sbr.rel (0) target = $region57
    $region56: #{_lambda_.1} parent=1 // pred_region
      _
    $region57: #{_lambda_.1} parent=1 // pred_fallthru
      _
    // Predicated region
    $region58: #{_lambda_.1} parent=1 // pred_check
      _
    $region59: #{_lambda_.1} parent=1 // pred_check_branch
      %52 = sbr.rel (0) target = $region61
    $region60: #{_lambda_.1} parent=1 // pred_region
      _
    $region61: #{_lambda_.1} parent=1 // pred_fallthru
      _
    // Predicated region
    $region62: #{_lambda_.1} parent=1 // pred_check
      _
    $region63: #{_lambda_.1} parent=1 // pred_check_branch
      %54 = sbr.rel (0) target = $region65
    $region64: #{_lambda_.1} parent=1 // pred_region
      _
    $region65: #{_lambda_.1} parent=1 // pred_fallthru
      _
    // Predicated region
    $region66: #{_lambda_.1} parent=1 // pred_check
      _
    $region67: #{_lambda_.1} parent=1 // pred_check_branch
      %56 = sbr.rel (0) target = $region69
    $region68: #{_lambda_.1} parent=1 // pred_region
      _
    $region69: #{_lambda_.1} parent=1 // pred_fallthru
      _
    %v57 = vld [vmem:[%s0] sm:$0xff]
    %v58 = vld [vmem:[%s0 + $0x8] sm:$0xff]
    %v59 = vld [vmem:[%s0 + $0x10] sm:$0xff]
    %v60 = vld [vmem:[%s0 + $0x18] sm:$0xff]
    %s61 = scalar_lea.vmem %s0, 32
    %v62 = vld [vmem:[%s61] sm:$0xff]
    %v63 = vld [vmem:[%s61 + $0x8] sm:$0xff]
    %v64 = vld [vmem:[%s61 + $0x10] sm:$0xff]
    %v65 = vld [vmem:[%s61 + $0x18] sm:$0xff]
    %v66 = vld [vmem:[%s1] sm:$0xff]
    %v67 = vld [vmem:[%s1 + $0x8] sm:$0xff]
    %v68 = vld [vmem:[%s1 + $0x10] sm:$0xff]
    %v69 = vld [vmem:[%s1 + $0x18] sm:$0xff]
    %v70 = vld [vmem:[%s1 + $0x20] sm:$0xff]
    %v71 = vld [vmem:[%s1 + $0x28] sm:$0xff]
    %v72 = vld [vmem:[%s3] sm:$0xff]
    %v73 = vld [vmem:[%s3 + $0x8] sm:$0xff]
    %vm74 = vcmask 261120
    %v76 = vsel %vm74, %v66, 0
    %v79 = vsel %vm74, %v67, 0
    %v82 = vsel %vm74, %v68, 0
    %v85 = vsel %vm74, %v69, 0
    %v88 = vsel %vm74, %v70, 0
    %v91 = vsel %vm74, %v71, 0
    %93 = vmatpush.msra.mxu0 0.0
    %94 = vmatpush.msra.mxu0 0.0
    %95 = vmatpush.msra.mxu0 0.0
    %96 = vmatpush.msra.mxu0 0.0
    %97 = vmatpush.msra.mxu0 0.0
    %98 = vmatpush.msra.mxu0 0.0
    %99 = vmatpush.msra.mxu0 0.0
    %100 = vmatpush.msra.mxu0 0.0
    %101 = vmatpush.msra.mxu0 0.0
    %102 = vmatpush.msra.mxu0 0.0
    %103 = vmatpush.msra.mxu0 0.0
    %104 = vmatpush.msra.mxu0 0.0
    %105 = vmatpush.msra.mxu0 %v60
    %106 = vmatpush.msra.mxu0 %v59
    %107 = vmatpush.msra.mxu0 %v58
    %108 = vmatpush.msra.mxu0 %v57
    %109 = vmatmul.f32.gmra.mxu0 %v76
    %v110 = vpop.f32.mrf.mxu0
    %v111 = vadd.f32 0.0, %v110
    %112 = vmatmul.f32.gmra.mxu0 %v79
    %v113 = vpop.f32.mrf.mxu0
    %v114 = vadd.f32 0.0, %v113
    %115 = vmatmul.f32.gmra.mxu0 %v82
    %v116 = vpop.f32.mrf.mxu0
    %v117 = vadd.f32 0.0, %v116
    %118 = vmatmul.f32.gmra.mxu0 %v85
    %v119 = vpop.f32.mrf.mxu0
    %v120 = vadd.f32 0.0, %v119
    %121 = vmatmul.f32.gmra.mxu0 %v88
    %v122 = vpop.f32.mrf.mxu0
    %v123 = vadd.f32 0.0, %v122
    %124 = vmatmul.f32.gmra.mxu0 %v91
    %v125 = vpop.f32.mrf.mxu0
    %v126 = vadd.f32 0.0, %v125
    %127 = vdwg.mxu0
    %130 = vrot.lane.b32.xlu0 %v117, 8
    %v131 = vpop.permute.xlu0 %130
    %132 = vrot.lane.b32.xlu0 %v120, 8
    %v133 = vpop.permute.xlu0 %132
    %138 = vrot.lane.b32.xlu0 %v123, 16
    %v139 = vpop.permute.xlu0 %138
    %140 = vrot.lane.b32.xlu0 %v126, 16
    %v141 = vpop.permute.xlu0 %140
    %vm144 = vcmask 64512
    %v145 = vsel %vm144, %v111, %v131
    %v146 = vsel %vm144, %v114, %v133
    %vm147 = vcmask 130048
    %v148 = vsel %vm147, %v145, %v139
    %v149 = vsel %vm147, %v146, %v141
    %v150 = vld [vmem:[%s2] sm:$0xff]
    %v151 = vld [vmem:[%s2 + $0x8] sm:$0xff]
    %v152 = vld [vmem:[%s2 + $0x10] sm:$0xff]
    %154 = vset.pattern.permute.xlu0 0
    %155 = vperm.xlu0 %154, %v72
    %v156 = vpop.permute.xlu0 %155
    %159 = vset.pattern.permute.xlu0 0
    %160 = vperm.xlu0 %159, %v73
    %v161 = vpop.permute.xlu0 %160
    %vm163 = vcmask 195584
    %v165 = vsel %vm163, %v148, 0
    %v168 = vsel %vm163, %v149, 0
    %170 = vmatpush.msra.mxu0 0.0
    %171 = vmatpush.msra.mxu0 0.0
    %172 = vmatpush.msra.mxu0 0.0
    %173 = vmatpush.msra.mxu0 0.0
    %174 = vmatpush.msra.mxu0 0.0
    %175 = vmatpush.msra.mxu0 0.0
    %176 = vmatpush.msra.mxu0 0.0
    %177 = vmatpush.msra.mxu0 0.0
    %178 = vmatpush.msra.mxu0 0.0
    %179 = vmatpush.msra.mxu0 0.0
    %180 = vmatpush.msra.mxu0 0.0
    %181 = vmatpush.msra.mxu0 0.0
    %182 = vmatpush.msra.mxu0 0.0
    %183 = vmatpush.msra.mxu0 %v152
    %184 = vmatpush.msra.mxu0 %v151
    %185 = vmatpush.msra.mxu0 %v150
    %186 = vmatmul.f32.gmra.mxu0 %v165
    %v187 = vpop.f32.mrf.mxu0
    %v188 = vadd.f32 %v156, %v187
    %189 = vmatmul.f32.gmra.mxu0 %v168
    %v190 = vpop.f32.mrf.mxu0
    %v191 = vadd.f32 %v161, %v190
    %192 = vdwg.mxu0
    %v193 = vsel %vm147, %v188, 0.0
    %194 = vadd.xlane.f32.xlu0 %v193
    %v195 = vpop.xlane.xlu0 %194
    %v196 = vsel %vm147, %v191, 0.0
    %197 = vadd.xlane.f32.xlu0 %v196
    %v198 = vpop.xlane.xlu0 %197
    %v199 = vadd.f32 %v195, 0.0
    %v200 = vadd.f32 %v198, 0.0
    %201 = vmatpush.msra.mxu0 0.0
    %202 = vmatpush.msra.mxu0 0.0
    %203 = vmatpush.msra.mxu0 0.0
    %204 = vmatpush.msra.mxu0 0.0
    %205 = vmatpush.msra.mxu0 0.0
    %206 = vmatpush.msra.mxu0 0.0
    %207 = vmatpush.msra.mxu0 0.0
    %208 = vmatpush.msra.mxu0 0.0
    %209 = vmatpush.msra.mxu0 0.0
    %210 = vmatpush.msra.mxu0 0.0
    %211 = vmatpush.msra.mxu0 0.0
    %212 = vmatpush.msra.mxu0 0.0
    %213 = vmatpush.msra.mxu0 %v65
    %214 = vmatpush.msra.mxu0 %v64
    %215 = vmatpush.msra.mxu0 %v63
    %216 = vmatpush.msra.mxu0 %v62
    %217 = vmatmul.f32.gmra.mxu0 %v76
    %v218 = vpop.f32.mrf.mxu0
    %v219 = vadd.f32 0.0, %v218
    %220 = vmatmul.f32.gmra.mxu0 %v79
    %v221 = vpop.f32.mrf.mxu0
    %v222 = vadd.f32 0.0, %v221
    %223 = vmatmul.f32.gmra.mxu0 %v82
    %v224 = vpop.f32.mrf.mxu0
    %v225 = vadd.f32 0.0, %v224
    %226 = vmatmul.f32.gmra.mxu0 %v85
    %v227 = vpop.f32.mrf.mxu0
    %v228 = vadd.f32 0.0, %v227
    %229 = vmatmul.f32.gmra.mxu0 %v88
    %v230 = vpop.f32.mrf.mxu0
    %v231 = vadd.f32 0.0, %v230
    %232 = vmatmul.f32.gmra.mxu0 %v91
    %v233 = vpop.f32.mrf.mxu0
    %v234 = vadd.f32 0.0, %v233
    %235 = vdwg.mxu0
    %238 = vrot.lane.b32.xlu0 %v225, 8
    %v239 = vpop.permute.xlu0 %238
    %240 = vrot.lane.b32.xlu0 %v228, 8
    %v241 = vpop.permute.xlu0 %240
    %246 = vrot.lane.b32.xlu0 %v231, 16
    %v247 = vpop.permute.xlu0 %246
    %248 = vrot.lane.b32.xlu0 %v234, 16
    %v249 = vpop.permute.xlu0 %248
    %v252 = vsel %vm144, %v219, %v239
    %v253 = vsel %vm144, %v222, %v241
    %v254 = vsel %vm147, %v252, %v247
    %v255 = vsel %vm147, %v253, %v249
    %v257 = vsel %vm163, %v254, 0
    %v260 = vsel %vm163, %v255, 0
    %262 = vmatpush.msra.mxu0 0.0
    %263 = vmatpush.msra.mxu0 0.0
    %264 = vmatpush.msra.mxu0 0.0
    %265 = vmatpush.msra.mxu0 0.0
    %266 = vmatpush.msra.mxu0 0.0
    %267 = vmatpush.msra.mxu0 0.0
    %268 = vmatpush.msra.mxu0 0.0
    %269 = vmatpush.msra.mxu0 0.0
    %270 = vmatpush.msra.mxu0 0.0
    %271 = vmatpush.msra.mxu0 0.0
    %272 = vmatpush.msra.mxu0 0.0
    %273 = vmatpush.msra.mxu0 0.0
    %274 = vmatpush.msra.mxu0 0.0
    %275 = vmatpush.msra.mxu0 %v152
    %276 = vmatpush.msra.mxu0 %v151
    %277 = vmatpush.msra.mxu0 %v150
    %278 = vmatmul.f32.gmra.mxu0 %v257
    %v279 = vpop.f32.mrf.mxu0
    %v280 = vadd.f32 %v156, %v279
    %281 = vmatmul.f32.gmra.mxu0 %v260
    %v282 = vpop.f32.mrf.mxu0
    %v283 = vadd.f32 %v161, %v282
    %284 = vdwg.mxu0
    %v285 = vsel %vm147, %v280, 0.0
    %286 = vadd.xlane.f32.xlu0 %v285
    %v287 = vpop.xlane.xlu0 %286
    %v288 = vsel %vm147, %v283, 0.0
    %289 = vadd.xlane.f32.xlu0 %v288
    %v290 = vpop.xlane.xlu0 %289
    %v291 = vadd.f32 %v199, %v287
    %v292 = vadd.f32 %v200, %v290
    %v293 = vmul.f32 %v291, 0.03125
    %v294 = vmul.f32 %v292, 0.03125
    %v295 = vsub.f32 %v188, %v293
    %v296 = vsub.f32 %v191, %v294
    %v297 = vmul.f32 %v295, %v295
    %v298 = vmul.f32 %v296, %v296
    %v299 = vsel %vm147, %v297, 0.0
    %300 = vadd.xlane.f32.xlu0 %v299
    %v301 = vpop.xlane.xlu0 %300
    %v302 = vsel %vm147, %v298, 0.0
    %303 = vadd.xlane.f32.xlu0 %v302
    %v304 = vpop.xlane.xlu0 %303
    %v305 = vadd.f32 %v301, 0.0
    %v306 = vadd.f32 %v304, 0.0
    %v307 = vsub.f32 %v280, %v293
    %v308 = vsub.f32 %v283, %v294
    %v309 = vmul.f32 %v307, %v307
    %v310 = vmul.f32 %v308, %v308
    %v311 = vsel %vm147, %v309, 0.0
    %312 = vadd.xlane.f32.xlu0 %v311
    %v313 = vpop.xlane.xlu0 %312
    %v314 = vsel %vm147, %v310, 0.0
    %315 = vadd.xlane.f32.xlu0 %v314
    %v316 = vpop.xlane.xlu0 %315
    %v317 = vadd.f32 %v305, %v313
    %v318 = vadd.f32 %v306, %v316
    %v319 = vmul.f32 %v317, 0.03125
    %v320 = vmul.f32 %v318, 0.03125
    %v321 = vld [vmem:[%s4] sm:$0xff]
    %v322 = vld [vmem:[%s4 + $0x8] sm:$0xff]
    %v323 = vadd.f32 %v319, 1e-05
    %v324 = vadd.f32 %v320, 1e-05
    %v325 = vrsqrt.pop %v323
    %v326 = vmul.f32 %v325, %v323
    %v327 = vmul.f32 %v326, %v325
    %v328 = vmul.f32 0.5, %v327
    %v329 = vsub.f32 1.5, %v328
    %v330 = vmul.f32 %v325, %v329
    %vm331 = vweird.f32 %v323
    %vm332 = vweird.f32 %v325
    %vm333 = vmor %vm331, %vm332
    %v334 = vsel %vm333, %v325, %v330
    %v335 = vrsqrt.pop %v324
    %v336 = vmul.f32 %v335, %v324
    %v337 = vmul.f32 %v336, %v335
    %v338 = vmul.f32 0.5, %v337
    %v339 = vsub.f32 1.5, %v338
    %v340 = vmul.f32 %v335, %v339
    %vm341 = vweird.f32 %v324
    %vm342 = vweird.f32 %v335
    %vm343 = vmor %vm341, %vm342
    %v344 = vsel %vm343, %v335, %v340
    %v345 = vmul.f32 %v321, %v334
    %v346 = vmul.f32 %v322, %v344
    %v347 = vld [vmem:[%s5] sm:$0xff]
    %v348 = vld [vmem:[%s5 + $0x8] sm:$0xff]
    %v349 = vmul.f32 %v293, %v345
    %v350 = vmul.f32 %v294, %v346
    %v351 = vsub.f32 %v347, %v349
    %v352 = vsub.f32 %v348, %v350
    %354 = vset.pattern.permute.xlu0 0
    %355 = vperm.xlu0 %354, %v345
    %v356 = vpop.permute.xlu0 %355
    %359 = vset.pattern.permute.xlu0 0
    %360 = vperm.xlu0 %359, %v346
    %v361 = vpop.permute.xlu0 %360
    %v363 = vmul.f32 %v188, %v356
    %v364 = vmul.f32 %v191, %v361
    %366 = vset.pattern.permute.xlu0 0
    %367 = vperm.xlu0 %366, %v351
    %v368 = vpop.permute.xlu0 %367
    %371 = vset.pattern.permute.xlu0 0
    %372 = vperm.xlu0 %371, %v352
    %v373 = vpop.permute.xlu0 %372
    %v375 = vadd.f32 %v363, %v368
    %v376 = vadd.f32 %v364, %v373
    %v377 = vmax.f32 %v375, 0.0
    %v378 = vmax.f32 %v376, 0.0
    %v379 = vmul.f32 %v280, %v356
    %v380 = vmul.f32 %v283, %v361
    %v381 = vadd.f32 %v379, %v368
    %v382 = vadd.f32 %v380, %v373
    %v383 = vmax.f32 %v381, 0.0
    %v384 = vmax.f32 %v382, 0.0
    %v385 = vld [vmem:[%s6] sm:$0xff]
    %v386 = vld [vmem:[%s6 + $0x8] sm:$0xff]
    %v387 = vld [vmem:[%s6 + $0x10] sm:$0xff]
    %v388 = vld [vmem:[%s8] sm:$0xff]
    %v390 = vsel %vm147, %v385, 0
    %v393 = vsel %vm147, %v386, 0
    %v396 = vsel %vm147, %v387, 0
    %398 = vmatpush.msra.mxu0 0.0
    %399 = vmatpush.msra.mxu0 0.0
    %400 = vmatpush.msra.mxu0 0.0
    %401 = vmatpush.msra.mxu0 0.0
    %402 = vmatpush.msra.mxu0 0.0
    %403 = vmatpush.msra.mxu0 0.0
    %404 = vmatpush.msra.mxu0 0.0
    %405 = vmatpush.msra.mxu0 0.0
    %406 = vmatpush.msra.mxu0 0.0
    %407 = vmatpush.msra.mxu0 0.0
    %408 = vmatpush.msra.mxu0 0.0
    %409 = vmatpush.msra.mxu0 0.0
    %410 = vmatpush.msra.mxu0 0.0
    %411 = vmatpush.msra.mxu0 0.0
    %412 = vmatpush.msra.mxu0 %v378
    %413 = vmatpush.msra.mxu0 %v377
    %414 = vmatmul.f32.gmra.mxu0 %v390
    %v415 = vpop.f32.mrf.mxu0
    %v416 = vadd.f32 0.0, %v415
    %417 = vmatmul.f32.gmra.mxu0 %v393
    %v418 = vpop.f32.mrf.mxu0
    %v419 = vadd.f32 0.0, %v418
    %420 = vmatmul.f32.gmra.mxu0 %v396
    %v421 = vpop.f32.mrf.mxu0
    %v422 = vadd.f32 0.0, %v421
    %423 = vdwg.mxu0
    %425 = vrot.lane.b32.xlu0 %v419, 16
    %v426 = vpop.permute.xlu0 %425
    %429 = vrot.lane.b32.xlu0 %v422, 32
    %v430 = vpop.permute.xlu0 %429
    %v432 = vsel %vm147, %v416, %v426
    %v433 = vsel %vm74, %v432, %v430
    %v434 = vld [vmem:[%s7] sm:$0xff]
    %v435 = vld [vmem:[%s7 + $0x8] sm:$0xff]
    %v436 = vld [vmem:[%s7 + $0x10] sm:$0xff]
    %v437 = vld [vmem:[%s7 + $0x18] sm:$0xff]
    %v438 = vld [vmem:[%s7 + $0x20] sm:$0xff]
    %v439 = vld [vmem:[%s7 + $0x28] sm:$0xff]
    %441 = vset.pattern.permute.xlu0 0
    %442 = vperm.xlu0 %441, %v388
    %v443 = vpop.permute.xlu0 %442
    %vm445 = vcmask 392192
    %v447 = vsel %vm445, %v433, 0
    %449 = vmatpush.msra.mxu0 0.0
    %450 = vmatpush.msra.mxu0 0.0
    %451 = vmatpush.msra.mxu0 0.0
    %452 = vmatpush.msra.mxu0 0.0
    %453 = vmatpush.msra.mxu0 0.0
    %454 = vmatpush.msra.mxu0 0.0
    %455 = vmatpush.msra.mxu0 0.0
    %456 = vmatpush.msra.mxu0 0.0
    %457 = vmatpush.msra.mxu0 0.0
    %458 = vmatpush.msra.mxu0 0.0
    %459 = vmatpush.msra.mxu0 %v439
    %460 = vmatpush.msra.mxu0 %v438
    %461 = vmatpush.msra.mxu0 %v437
    %462 = vmatpush.msra.mxu0 %v436
    %463 = vmatpush.msra.mxu0 %v435
    %464 = vmatpush.msra.mxu0 %v434
    %465 = vmatmul.f32.gmra.mxu0 %v447
    %v466 = vpop.f32.mrf.mxu0
    %v467 = vadd.f32 %v443, %v466
    %468 = vdwg.mxu0
    %v469 = vsel %vm74, %v467, 0.0
    %470 = vadd.xlane.f32.xlu0 %v469
    %v471 = vpop.xlane.xlu0 %470
    %v472 = vadd.f32 %v471, 0.0
    %473 = vmatpush.msra.mxu0 0.0
    %474 = vmatpush.msra.mxu0 0.0
    %475 = vmatpush.msra.mxu0 0.0
    %476 = vmatpush.msra.mxu0 0.0
    %477 = vmatpush.msra.mxu0 0.0
    %478 = vmatpush.msra.mxu0 0.0
    %479 = vmatpush.msra.mxu0 0.0
    %480 = vmatpush.msra.mxu0 0.0
    %481 = vmatpush.msra.mxu0 0.0
    %482 = vmatpush.msra.mxu0 0.0
    %483 = vmatpush.msra.mxu0 0.0
    %484 = vmatpush.msra.mxu0 0.0
    %485 = vmatpush.msra.mxu0 0.0
    %486 = vmatpush.msra.mxu0 0.0
    %487 = vmatpush.msra.mxu0 %v384
    %488 = vmatpush.msra.mxu0 %v383
    %489 = vmatmul.f32.gmra.mxu0 %v390
    %v490 = vpop.f32.mrf.mxu0
    %v491 = vadd.f32 0.0, %v490
    %492 = vmatmul.f32.gmra.mxu0 %v393
    %v493 = vpop.f32.mrf.mxu0
    %v494 = vadd.f32 0.0, %v493
    %495 = vmatmul.f32.gmra.mxu0 %v396
    %v496 = vpop.f32.mrf.mxu0
    %v497 = vadd.f32 0.0, %v496
    %498 = vdwg.mxu0
    %500 = vrot.lane.b32.xlu0 %v494, 16
    %v501 = vpop.permute.xlu0 %500
    %504 = vrot.lane.b32.xlu0 %v497, 32
    %v505 = vpop.permute.xlu0 %504
    %v507 = vsel %vm147, %v491, %v501
    %v508 = vsel %vm74, %v507, %v505
    %v510 = vsel %vm445, %v508, 0
    %512 = vmatpush.msra.mxu0 0.0
    %513 = vmatpush.msra.mxu0 0.0
    %514 = vmatpush.msra.mxu0 0.0
    %515 = vmatpush.msra.mxu0 0.0
    %516 = vmatpush.msra.mxu0 0.0
    %517 = vmatpush.msra.mxu0 0.0
    %518 = vmatpush.msra.mxu0 0.0
    %519 = vmatpush.msra.mxu0 0.0
    %520 = vmatpush.msra.mxu0 0.0
    %521 = vmatpush.msra.mxu0 0.0
    %522 = vmatpush.msra.mxu0 %v439
    %523 = vmatpush.msra.mxu0 %v438
    %524 = vmatpush.msra.mxu0 %v437
    %525 = vmatpush.msra.mxu0 %v436
    %526 = vmatpush.msra.mxu0 %v435
    %527 = vmatpush.msra.mxu0 %v434
    %528 = vmatmul.f32.gmra.mxu0 %v510
    %v529 = vpop.f32.mrf.mxu0
    %v530 = vadd.f32 %v443, %v529
    %531 = vdwg.mxu0
    %v532 = vsel %vm74, %v530, 0.0
    %533 = vadd.xlane.f32.xlu0 %v532
    %v534 = vpop.xlane.xlu0 %533
    %v535 = vadd.f32 %v472, %v534
    %v536 = vmul.f32 %v535, 0.015625
    %v537 = vsub.f32 %v467, %v536
    %v538 = vmul.f32 %v537, %v537
    %v539 = vsel %vm74, %v538, 0.0
    %540 = vadd.xlane.f32.xlu0 %v539
    %v541 = vpop.xlane.xlu0 %540
    %v542 = vadd.f32 %v541, 0.0
    %v543 = vsub.f32 %v530, %v536
    %v544 = vmul.f32 %v543, %v543
    %v545 = vsel %vm74, %v544, 0.0
    %546 = vadd.xlane.f32.xlu0 %v545
    %v547 = vpop.xlane.xlu0 %546
    %v548 = vadd.f32 %v542, %v547
    %v549 = vmul.f32 %v548, 0.015625
    %v550 = vld [vmem:[%s9] sm:$0xff]
    %v551 = vadd.f32 %v549, 1e-05
    %v552 = vrsqrt.pop %v551
    %v553 = vmul.f32 %v552, %v551
    %v554 = vmul.f32 %v553, %v552
    %v555 = vmul.f32 0.5, %v554
    %v556 = vsub.f32 1.5, %v555
    %v557 = vmul.f32 %v552, %v556
    %vm558 = vweird.f32 %v551
    %vm559 = vweird.f32 %v552
    %vm560 = vmor %vm558, %vm559
    %v561 = vsel %vm560, %v552, %v557
    %v562 = vmul.f32 %v550, %v561
    %v563 = vld [vmem:[%s10] sm:$0xff]
    %v564 = vmul.f32 %v536, %v562
    %v565 = vsub.f32 %v563, %v564
    %567 = vset.pattern.permute.xlu0 0
    %568 = vperm.xlu0 %567, %v562
    %v569 = vpop.permute.xlu0 %568
    %v571 = vmul.f32 %v467, %v569
    %573 = vset.pattern.permute.xlu0 0
    %574 = vperm.xlu0 %573, %v565
    %v575 = vpop.permute.xlu0 %574
    %v577 = vadd.f32 %v571, %v575
    %v578 = vmax.f32 %v577, 0.0
    %v579 = vmul.f32 %v530, %v569
    %v580 = vadd.f32 %v579, %v575
    %v581 = vmax.f32 %v580, 0.0
    %v582 = vld [vmem:[%s11] sm:$0xff]
    %v583 = vld [vmem:[%s11 + $0x8] sm:$0xff]
    %v584 = vld [vmem:[%s11 + $0x10] sm:$0xff]
    %v585 = vld [vmem:[%s12] sm:$0xff]
    %v586 = vlaneseq
    %v587 = vand.u32 %v586, 127
    %v589 = vsel %vm144, %v582, 0
    %v592 = vsel %vm144, %v583, 0
    %v595 = vsel %vm144, %v584, 0
    %597 = vmatpush.msra.mxu0 0.0
    %598 = vmatpush.msra.mxu0 0.0
    %599 = vmatpush.msra.mxu0 0.0
    %600 = vmatpush.msra.mxu0 0.0
    %601 = vmatpush.msra.mxu0 0.0
    %602 = vmatpush.msra.mxu0 0.0
    %603 = vmatpush.msra.mxu0 0.0
    %604 = vmatpush.msra.mxu0 0.0
    %605 = vmatpush.msra.mxu0 0.0
    %606 = vmatpush.msra.mxu0 0.0
    %607 = vmatpush.msra.mxu0 0.0
    %608 = vmatpush.msra.mxu0 0.0
    %609 = vmatpush.msra.mxu0 0.0
    %610 = vmatpush.msra.mxu0 0.0
    %611 = vmatpush.msra.mxu0 0.0
    %612 = vmatpush.msra.mxu0 %v578
    %613 = vmatmul.f32.gmra.mxu0 %v589
    %v614 = vpop.f32.mrf.mxu0
    %v615 = vadd.f32 0.0, %v614
    %616 = vmatmul.f32.gmra.mxu0 %v592
    %v617 = vpop.f32.mrf.mxu0
    %v618 = vadd.f32 0.0, %v617
    %619 = vmatmul.f32.gmra.mxu0 %v595
    %v620 = vpop.f32.mrf.mxu0
    %v621 = vadd.f32 0.0, %v620
    %622 = vdwg.mxu0
    %vm623 = vcmask 1047808
    %624 = vrot.lane.b32.xlu0 %v615, 32
    %v625 = vpop.permute.xlu0 %624
    %v626 = vsel %vm623, %v625, %v615
    %627 = vrot.lane.b32.xlu0 %v626, 32
    %v628 = vpop.permute.xlu0 %627
    %v629 = vsel %vm623, %v628, %v615
    %vm630 = vcmp.ge.s32.totalorder %v587, 4294967295
    %vm631 = vcmp.lt.s32.totalorder %v587, 31
    %vm632 = vmand %vm630, %vm631
    %634 = vrot.lane.b32.xlu0 %v629, 127
    %v635 = vpop.permute.xlu0 %634
    %v637 = vsel %vm632, %v635, 0.0
    %v638 = vadd.f32 %v637, 0.0
    %v639 = vadd.f32 %v638, %v618
    %640 = vrot.lane.b32.xlu0 %v621, 32
    %v641 = vpop.permute.xlu0 %640
    %v642 = vsel %vm623, %v641, %v621
    %643 = vrot.lane.b32.xlu0 %v642, 32
    %v644 = vpop.permute.xlu0 %643
    %v645 = vsel %vm623, %v644, %v621
    %vm646 = vcmp.ge.s32.totalorder %v587, 1
    %vm647 = vcmp.lt.s32.totalorder %v587, 33
    %vm648 = vmand %vm646, %vm647
    %650 = vrot.lane.b32.xlu0 %v645, 97
    %v651 = vpop.permute.xlu0 %650
    %v653 = vsel %vm648, %v651, 0.0
    %v654 = vadd.f32 %v639, %v653
    %656 = vset.pattern.permute.xlu0 0
    %657 = vperm.xlu0 %656, %v585
    %v658 = vpop.permute.xlu0 %657
    %v660 = vadd.f32 %v654, %v658
    %v661 = vsel %vm74, %v660, 0.0
    %662 = vadd.xlane.f32.xlu0 %v661
    %v663 = vpop.xlane.xlu0 %662
    %v664 = vadd.f32 %v663, 0.0
    %665 = vmatpush.msra.mxu0 0.0
    %666 = vmatpush.msra.mxu0 0.0
    %667 = vmatpush.msra.mxu0 0.0
    %668 = vmatpush.msra.mxu0 0.0
    %669 = vmatpush.msra.mxu0 0.0
    %670 = vmatpush.msra.mxu0 0.0
    %671 = vmatpush.msra.mxu0 0.0
    %672 = vmatpush.msra.mxu0 0.0
    %673 = vmatpush.msra.mxu0 0.0
    %674 = vmatpush.msra.mxu0 0.0
    %675 = vmatpush.msra.mxu0 0.0
    %676 = vmatpush.msra.mxu0 0.0
    %677 = vmatpush.msra.mxu0 0.0
    %678 = vmatpush.msra.mxu0 0.0
    %679 = vmatpush.msra.mxu0 0.0
    %680 = vmatpush.msra.mxu0 %v581
    %681 = vmatmul.f32.gmra.mxu0 %v589
    %v682 = vpop.f32.mrf.mxu0
    %v683 = vadd.f32 0.0, %v682
    %684 = vmatmul.f32.gmra.mxu0 %v592
    %v685 = vpop.f32.mrf.mxu0
    %v686 = vadd.f32 0.0, %v685
    %687 = vmatmul.f32.gmra.mxu0 %v595
    %v688 = vpop.f32.mrf.mxu0
    %v689 = vadd.f32 0.0, %v688
    %690 = vdwg.mxu0
    %691 = vrot.lane.b32.xlu0 %v683, 32
    %v692 = vpop.permute.xlu0 %691
    %v693 = vsel %vm623, %v692, %v683
    %694 = vrot.lane.b32.xlu0 %v693, 32
    %v695 = vpop.permute.xlu0 %694
    %v696 = vsel %vm623, %v695, %v683
    %698 = vrot.lane.b32.xlu0 %v696, 127
    %v699 = vpop.permute.xlu0 %698
    %v701 = vsel %vm632, %v699, 0.0
    %v702 = vadd.f32 %v701, 0.0
    %v703 = vadd.f32 %v702, %v686
    %704 = vrot.lane.b32.xlu0 %v689, 32
    %v705 = vpop.permute.xlu0 %704
    %v706 = vsel %vm623, %v705, %v689
    %707 = vrot.lane.b32.xlu0 %v706, 32
    %v708 = vpop.permute.xlu0 %707
    %v709 = vsel %vm623, %v708, %v689
    %711 = vrot.lane.b32.xlu0 %v709, 97
    %v712 = vpop.permute.xlu0 %711
    %v714 = vsel %vm648, %v712, 0.0
    %v715 = vadd.f32 %v703, %v714
    %v716 = vadd.f32 %v715, %v658
    %v717 = vsel %vm74, %v716, 0.0
    %718 = vadd.xlane.f32.xlu0 %v717
    %v719 = vpop.xlane.xlu0 %718
    %v720 = vadd.f32 %v664, %v719
    %v721 = vmul.f32 %v720, 0.015625
    %v722 = vsub.f32 %v660, %v721
    %v723 = vmul.f32 %v722, %v722
    %v724 = vsel %vm74, %v723, 0.0
    %725 = vadd.xlane.f32.xlu0 %v724
    %v726 = vpop.xlane.xlu0 %725
    %v727 = vadd.f32 %v726, 0.0
    %v728 = vsub.f32 %v716, %v721
    %v729 = vmul.f32 %v728, %v728
    %v730 = vsel %vm74, %v729, 0.0
    %731 = vadd.xlane.f32.xlu0 %v730
    %v732 = vpop.xlane.xlu0 %731
    %v733 = vadd.f32 %v727, %v732
    %v734 = vmul.f32 %v733, 0.015625
    %v735 = vld [vmem:[%s13] sm:$0xff]
    %v736 = vadd.f32 %v734, 1e-05
    %v737 = vrsqrt.pop %v736
    %v738 = vmul.f32 %v737, %v736
    %v739 = vmul.f32 %v738, %v737
    %v740 = vmul.f32 0.5, %v739
    %v741 = vsub.f32 1.5, %v740
    %v742 = vmul.f32 %v737, %v741
    %vm743 = vweird.f32 %v736
    %vm744 = vweird.f32 %v737
    %vm745 = vmor %vm743, %vm744
    %v746 = vsel %vm745, %v737, %v742
    %v747 = vmul.f32 %v735, %v746
    %v748 = vld [vmem:[%s14] sm:$0xff]
    %v749 = vmul.f32 %v721, %v747
    %v750 = vsub.f32 %v748, %v749
    %752 = vset.pattern.permute.xlu0 0
    %753 = vperm.xlu0 %752, %v747
    %v754 = vpop.permute.xlu0 %753
    %v756 = vmul.f32 %v660, %v754
    %758 = vset.pattern.permute.xlu0 0
    %759 = vperm.xlu0 %758, %v750
    %v760 = vpop.permute.xlu0 %759
    %v762 = vadd.f32 %v756, %v760
    %v763 = vmax.f32 %v762, 0.0
    %v764 = vmul.f32 %v716, %v754
    %v765 = vadd.f32 %v764, %v760
    %v766 = vmax.f32 %v765, 0.0
    %v767 = vld [vmem:[%s15] sm:$0xff]
    %v768 = vld [vmem:[%s15 + $0x8] sm:$0xff]
    %v769 = vld [vmem:[%s16] sm:$0xff]
    %v771 = vsel %vm144, %v767, 0
    %v774 = vsel %vm144, %v768, 0
    %776 = vmatpush.msra.mxu0 0.0
    %777 = vmatpush.msra.mxu0 0.0
    %778 = vmatpush.msra.mxu0 0.0
    %779 = vmatpush.msra.mxu0 0.0
    %780 = vmatpush.msra.mxu0 0.0
    %781 = vmatpush.msra.mxu0 0.0
    %782 = vmatpush.msra.mxu0 0.0
    %783 = vmatpush.msra.mxu0 0.0
    %784 = vmatpush.msra.mxu0 0.0
    %785 = vmatpush.msra.mxu0 0.0
    %786 = vmatpush.msra.mxu0 0.0
    %787 = vmatpush.msra.mxu0 0.0
    %788 = vmatpush.msra.mxu0 0.0
    %789 = vmatpush.msra.mxu0 0.0
    %790 = vmatpush.msra.mxu0 0.0
    %791 = vmatpush.msra.mxu0 %v763
    %792 = vmatmul.f32.gmra.mxu0 %v771
    %v793 = vpop.f32.mrf.mxu0
    %v794 = vadd.f32 0.0, %v793
    %795 = vmatmul.f32.gmra.mxu0 %v774
    %v796 = vpop.f32.mrf.mxu0
    %v797 = vadd.f32 0.0, %v796
    %798 = vdwg.mxu0
    %v799 = vadd.f32 %v794, 0.0
    %800 = vrot.lane.b32.xlu0 %v797, 32
    %v801 = vpop.permute.xlu0 %800
    %v802 = vsel %vm623, %v801, %v797
    %803 = vrot.lane.b32.xlu0 %v802, 32
    %v804 = vpop.permute.xlu0 %803
    %v805 = vsel %vm623, %v804, %v797
    %807 = vrot.lane.b32.xlu0 %v805, 127
    %v808 = vpop.permute.xlu0 %807
    %v810 = vsel %vm632, %v808, 0.0
    %v811 = vadd.f32 %v799, %v810
    %813 = vset.pattern.permute.xlu0 0
    %814 = vperm.xlu0 %813, %v769
    %v815 = vpop.permute.xlu0 %814
    %v817 = vadd.f32 %v811, %v815
    %v818 = vtanh.pop %v817
    %vm819 = vcmask 248832
    %820 = vst.msk [vmem:[#allocation2] sm:$0xf] %vm819, %v818
    %821 = vmatpush.msra.mxu0 0.0
    %822 = vmatpush.msra.mxu0 0.0
    %823 = vmatpush.msra.mxu0 0.0
    %824 = vmatpush.msra.mxu0 0.0
    %825 = vmatpush.msra.mxu0 0.0
    %826 = vmatpush.msra.mxu0 0.0
    %827 = vmatpush.msra.mxu0 0.0
    %828 = vmatpush.msra.mxu0 0.0
    %829 = vmatpush.msra.mxu0 0.0
    %830 = vmatpush.msra.mxu0 0.0
    %831 = vmatpush.msra.mxu0 0.0
    %832 = vmatpush.msra.mxu0 0.0
    %833 = vmatpush.msra.mxu0 0.0
    %834 = vmatpush.msra.mxu0 0.0
    %835 = vmatpush.msra.mxu0 0.0
    %836 = vmatpush.msra.mxu0 %v766
    %837 = vmatmul.f32.gmra.mxu0 %v771
    %v838 = vpop.f32.mrf.mxu0
    %v839 = vadd.f32 0.0, %v838
    %840 = vmatmul.f32.gmra.mxu0 %v774
    %v841 = vpop.f32.mrf.mxu0
    %v842 = vadd.f32 0.0, %v841
    %843 = vdwg.mxu0
    %v844 = vadd.f32 %v839, 0.0
    %845 = vrot.lane.b32.xlu0 %v842, 32
    %v846 = vpop.permute.xlu0 %845
    %v847 = vsel %vm623, %v846, %v842
    %848 = vrot.lane.b32.xlu0 %v847, 32
    %v849 = vpop.permute.xlu0 %848
    %v850 = vsel %vm623, %v849, %v842
    %852 = vrot.lane.b32.xlu0 %v850, 127
    %v853 = vpop.permute.xlu0 %852
    %v855 = vsel %vm632, %v853, 0.0
    %v856 = vadd.f32 %v844, %v855
    %v857 = vadd.f32 %v856, %v815
    %v858 = vtanh.pop %v857
    %s859 = scalar_lea.vmem [#allocation2], 4
    %860 = vst.msk [vmem:[%s859] sm:$0xf] %vm819, %v858
    // Predicated region
    $region70: #{_lambda_.1} parent=1 // pred_check
      _
    $region71: #{_lambda_.1} parent=1 // pred_check_branch
      %862 = sbr.rel (0) target = $region73
    $region72: #{_lambda_.1} parent=1 // pred_region
      %864 = vsyncadd [#allocation3], 0
      %s865 = sshll.u32 [#allocation2], 4
      %s866 = int_to_ptr.vmem [resolvable:$true] %s865
      %s867 = sshll.u32 %s17, 4
      %s868 = int_to_ptr.hbm [resolvable:$true] %s867
      %873 = dma.vmem_to_hbm [thread:$0]  %s866, 128, %s868, [#allocation3], 64, 64, 4
    $region73: #{_lambda_.1} parent=1 // pred_fallthru
      _
    // Predicated region
    $region74: #{_lambda_.1} parent=1 // pred_check
      _
    $region75: #{_lambda_.1} parent=1 // pred_check_branch
      %875 = sbr.rel (0) target = $region77
    $region76: #{_lambda_.1} parent=1 // pred_region
      %877 = dma.done [#allocation3], 128
    $region77: #{_lambda_.1} parent=1 // pred_fallthru
      _
    %878 = vsyncpa [#allocation3], 1

</llo_original>
